<compile_context>
chip_gen: v5e
topology: v5e:2x2
jax: 0.10.0
libtpu: 0.0.40
codegen_flags: <defaults>
</compile_context>

<pallas_src>
import math
from functools import partial

import jax
import jax.numpy as jnp
from jax.experimental import pallas as pl
from jax.experimental.pallas import tpu as pltpu


# ------------------------------ tiling config ------------------------------

ROW_TILE = 256            # cap for the sublane (rows of B*S) tile
COL_TILE = 512            # cap for the lane (output feature) tile
EXP_TILE = 512            # cap for the FFN expand-dim reduction tile
# Explicit scoped-VMEM budget: fits under v7x's 64 MiB physical VMEM and well
# under v5e/v6e's 128 MiB, while allowing larger-than-default tiles.
VMEM_LIMIT_BYTES = 48 * 1024 * 1024
# MXU input dtype: bf16 on all of v5e/v6e/v7x; accumulation stays f32.
MXU_DTYPE = jnp.bfloat16
LN_EPS = 1e-5             # PyTorch nn.LayerNorm default


def _pick_tile(dim, cap, align):
    """Largest tile <= cap that divides `dim` and respects TPU alignment."""
    if dim <= cap:
        return dim
    t = (cap // align) * align
    while t >= align:
        if dim % t == 0:
            return t
        t -= align
    return dim


def _cparams(*semantics):
    return pltpu.CompilerParams(dimension_semantics=semantics,
                                vmem_limit_bytes=VMEM_LIMIT_BYTES)


# ---------------------------- elementwise helpers ---------------------------

def _erf(x):
    # Abramowitz & Stegun 7.1.26 (|err| < 1.5e-7 ~ f32 eps); lowers to
    # exp/mul/add only (f32 VPU + EUP), no special-function dependence.
    a1, a2, a3, a4, a5 = (0.254829592, -0.284496736, 1.421413741,
                          -1.453152027, 1.061405429)
    p = 0.3275911
    s = jnp.where(x >= 0.0, 1.0, -1.0)
    ax = jnp.abs(x)
    t = 1.0 / (1.0 + p * ax)
    poly = ((((a5 * t + a4) * t + a3) * t + a2) * t + a1) * t
    return s * (1.0 - poly * jnp.exp(-ax * ax))


def _gelu(x):
    return 0.5 * x * (1.0 + _erf(x * (1.0 / math.sqrt(2.0))))


def _layernorm_f32(x, gamma, beta):
    mu = jnp.mean(x, axis=-1, keepdims=True)
    var = jnp.mean(jnp.square(x - mu), axis=-1, keepdims=True)
    return (x - mu) * jax.lax.rsqrt(var + LN_EPS) * gamma + beta


_TRANS_B = (((1,), (1,)), ((), ()))   # contract trailing dims: x (M,K) @ w (N,K)^T


# ------------------------- fused LayerNorm -> Linear -------------------------
# out = LayerNorm(x) @ W^T + b, W in torch (out,in) layout.
# Grid (M/tm, N/tn); x tile resident across N; LN(x) cached (bf16) at j == 0.

def _ln_linear_kernel(x_ref, g_ref, b_ref, w_ref, bias_ref, o_ref, xn_ref):
    @pl.when(pl.program_id(1) == 0)
    def _():
        xn = _layernorm_f32(x_ref[...].astype(jnp.float32),
                            g_ref[...], b_ref[...])
        xn_ref[...] = xn.astype(MXU_DTYPE)

    acc = jax.lax.dot_general(
        xn_ref[...], w_ref[...].astype(MXU_DTYPE), _TRANS_B,
        preferred_element_type=jnp.float32)
    o_ref[...] = (acc + bias_ref[...]).astype(o_ref.dtype)


def ln_linear(x, g, b, w, bias):
    """x: (M, K); w: (N, K) torch layout; returns (M, N)."""
    M, K = x.shape
    N = w.shape[0]
    tm = _pick_tile(M, ROW_TILE, 8)
    tn = _pick_tile(N, COL_TILE, 128)
    return pl.pallas_call(
        _ln_linear_kernel,
        out_shape=jax.ShapeDtypeStruct((M, N), x.dtype),
        grid=(M // tm, N // tn),
        in_specs=[pl.BlockSpec((tm, K), lambda i, j: (i, 0)),
                  pl.BlockSpec((1, K), lambda i, j: (0, 0)),
                  pl.BlockSpec((1, K), lambda i, j: (0, 0)),
                  pl.BlockSpec((tn, K), lambda i, j: (j, 0)),
                  pl.BlockSpec((1, tn), lambda i, j: (0, j))],
        out_specs=pl.BlockSpec((tm, tn), lambda i, j: (i, j)),
        scratch_shapes=[pltpu.VMEM((tm, K), MXU_DTYPE)],        # cached LN(x)
        compiler_params=_cparams("parallel", "arbitrary"),
    )(x, g.reshape(1, K), b.reshape(1, K), w, bias.reshape(1, N))


# ----------------------- Linear + residual (out-proj) ------------------------
# out = res + y @ W^T + b   (attention output projection, residual fused).

def _linear_residual_kernel(y_ref, w_ref, b_ref, res_ref, o_ref):
    acc = jax.lax.dot_general(
        y_ref[...].astype(MXU_DTYPE), w_ref[...].astype(MXU_DTYPE), _TRANS_B,
        preferred_element_type=jnp.float32)
    o_ref[...] = (res_ref[...].astype(jnp.float32) + acc
                  + b_ref[...]).astype(o_ref.dtype)


def linear_residual(y, w, b, res):
    M, K = y.shape
    N = w.shape[0]
    tm = _pick_tile(M, ROW_TILE, 8)
    tn = _pick_tile(N, COL_TILE, 128)
    return pl.pallas_call(
        _linear_residual_kernel,
        out_shape=jax.ShapeDtypeStruct((M, N), y.dtype),
        grid=(M // tm, N // tn),
        in_specs=[pl.BlockSpec((tm, K), lambda i, j: (i, 0)),
                  pl.BlockSpec((tn, K), lambda i, j: (j, 0)),
                  pl.BlockSpec((1, tn), lambda i, j: (0, j)),
                  pl.BlockSpec((tm, tn), lambda i, j: (i, j))],
        out_specs=pl.BlockSpec((tm, tn), lambda i, j: (i, j)),
        compiler_params=_cparams("parallel", "parallel"),
    )(y, w, b.reshape(1, N), res)


# ------------------ fused LayerNorm -> FFN -> residual -----------------------
# out = x + fc2(GELU(fc1(LN(x)))).  Grid (M/tm, E/te): rows parallel, expand
# dim is a reduction ("arbitrary") with a VMEM f32 accumulator; LN(x) cached
# in bf16 at e == 0 so it is computed (and cast) once per row tile.

def _ln_ffn_kernel(x_ref, g_ref, bln_ref, w1_ref, b1_ref, w2_ref, b2_ref,
                   o_ref, acc_ref, xn_ref):
    e = pl.program_id(1)

    @pl.when(e == 0)
    def _():
        xn = _layernorm_f32(x_ref[...].astype(jnp.float32),
                            g_ref[...], bln_ref[...])
        xn_ref[...] = xn.astype(MXU_DTYPE)
        acc_ref[...] = jnp.zeros_like(acc_ref)

    h = jax.lax.dot_general(
        xn_ref[...], w1_ref[...].astype(MXU_DTYPE), _TRANS_B,
        preferred_element_type=jnp.float32) + b1_ref[...]
    h = _gelu(h)                                    # exact GELU, f32
    acc_ref[...] += jax.lax.dot_general(
        h.astype(MXU_DTYPE), w2_ref[...].astype(MXU_DTYPE), _TRANS_B,
        preferred_element_type=jnp.float32)

    @pl.when(e == pl.num_programs(1) - 1)
    def _():
        o_ref[...] = (x_ref[...].astype(jnp.float32) + acc_ref[...]
                      + b2_ref[...]).astype(o_ref.dtype)


def ln_ffn_residual(x, g, bln, w1, b1, w2, b2):
    """x: (M, H); w1: (E, H); w2: (H, E)  (torch layouts)."""
    M, H = x.shape
    E = w1.shape[0]
    tm = _pick_tile(M, ROW_TILE, 8)
    te = _pick_tile(E, EXP_TILE, 128)
    return pl.pallas_call(
        _ln_ffn_kernel,
        out_shape=jax.ShapeDtypeStruct((M, H), x.dtype),
        grid=(M // tm, E // te),
        in_specs=[pl.BlockSpec((tm, H), lambda i, e: (i, 0)),   # x (resident)
                  pl.BlockSpec((1, H), lambda i, e: (0, 0)),    # ln gamma
                  pl.BlockSpec((1, H), lambda i, e: (0, 0)),    # ln beta
                  pl.BlockSpec((te, H), lambda i, e: (e, 0)),   # fc1 W tile
                  pl.BlockSpec((1, te), lambda i, e: (0, e)),   # fc1 b tile
                  pl.BlockSpec((H, te), lambda i, e: (0, e)),   # fc2 W tile
                  pl.BlockSpec((1, H), lambda i, e: (0, 0))],   # fc2 b
        out_specs=pl.BlockSpec((tm, H), lambda i, e: (i, 0)),
        scratch_shapes=[pltpu.VMEM((tm, H), jnp.float32),       # f32 accumulator
                        pltpu.VMEM((tm, H), MXU_DTYPE)],        # cached LN(x)
        compiler_params=_cparams("parallel", "arbitrary"),
    )(x, g.reshape(1, H), bln.reshape(1, H), w1, b1.reshape(1, E),
      w2, b2.reshape(1, H))


# ------------------------------- attention ----------------------------------
# Grid over batch; the QKV head split happens inside the kernel via static
# lane slices of the (S, 3H) block; per-head outputs are assembled and written
# with ONE lane-dense (S, H) store per batch row (no JAX-side head reshapes).

def _attn_kernel(qkv_ref, o_ref, *, num_heads, scale):
    S = qkv_ref.shape[1]
    H = o_ref.shape[2]
    hd = H // num_heads
    row = jax.lax.broadcasted_iota(jnp.int32, (S, S), 0)
    col = jax.lax.broadcasted_iota(jnp.int32, (S, S), 1)
    causal = col <= row
    # TODO(synk): for long sequences, flash-tile the KV axis (online softmax,
    # causal tile skip) and pack head groups onto the 128-lane axis; at this
    # toy head_dim the static per-head unroll keeps the whole split/merge in
    # VMEM, which is the main HBM-traffic win.
    outs = []
    for h in range(num_heads):
        lo = h * hd
        q = qkv_ref[0, :, lo:lo + hd]
        k = qkv_ref[0, :, H + lo:H + lo + hd]
        v = qkv_ref[0, :, 2 * H + lo:2 * H + lo + hd]
        s = jax.lax.dot_general(
            q.astype(MXU_DTYPE), k.astype(MXU_DTYPE), _TRANS_B,
            preferred_element_type=jnp.float32) * scale          # (S, S) f32
        s = jnp.where(causal, s, -1e30)                          # causal mask
        m = jnp.max(s, axis=-1, keepdims=True)
        p = jnp.exp(s - m)
        p = p * pl.reciprocal(jnp.sum(p, axis=-1, keepdims=True), approx=True)
        o = jax.lax.dot_general(
            p.astype(MXU_DTYPE), v.astype(MXU_DTYPE),
            (((1,), (0,)), ((), ())),
            preferred_element_type=jnp.float32)                  # (S, hd)
        outs.append(o)
    o_ref[0, :, :] = jnp.concatenate(outs, axis=-1).astype(o_ref.dtype)


def causal_attention(qkv, *, num_heads, scale):
    """qkv: (B, S, 3H) -> (B, S, H)."""
    B, S, H3 = qkv.shape
    H = H3 // 3
    return pl.pallas_call(
        partial(_attn_kernel, num_heads=num_heads, scale=scale),
        out_shape=jax.ShapeDtypeStruct((B, S, H), qkv.dtype),
        grid=(B,),
        in_specs=[pl.BlockSpec((1, S, H3), lambda b: (b, 0, 0))],
        out_specs=pl.BlockSpec((1, S, H), lambda b: (b, 0, 0)),
        compiler_params=_cparams("parallel"),
    )(qkv)


# ----------------------------- cross entropy ---------------------------------
# Tiled over rows; per-tile SUM is accumulated in a VMEM scalar and the mean is
# taken once on the last tile (a per-tile mean would be wrong).

def _xent_kernel(logits_ref, labels_ref, loss_ref, acc_ref, *, total_rows):
    i = pl.program_id(0)

    @pl.when(i == 0)
    def _():
        acc_ref[...] = jnp.zeros_like(acc_ref)

    logits = logits_ref[...].astype(jnp.float32)          # (tm, V)
    labels = labels_ref[...]                              # (tm, 1) int32
    m = jnp.max(logits, axis=-1, keepdims=True)
    lse = m + jnp.log(jnp.sum(jnp.exp(logits - m), axis=-1, keepdims=True))
    # TODO(synk): for very large V, tile V with an online logsumexp and an
    # indexed target-logit gather instead of the one-hot select below.
    col = jax.lax.broadcasted_iota(jnp.int32, logits.shape, 1)
    tgt = jnp.sum(jnp.where(col == labels, logits, 0.0), axis=-1, keepdims=True)
    acc_ref[...] += jnp.sum(lse - tgt)

    @pl.when(i == pl.num_programs(0) - 1)
    def _():
        loss_ref[...] = acc_ref[...] * (1.0 / total_rows)


def cross_entropy(logits, labels):
    """logits: (M, V) f32, labels: (M,) int -> scalar mean cross-entropy."""
    M, V = logits.shape
    tm = _pick_tile(M, ROW_TILE, 8)
    out = pl.pallas_call(
        partial(_xent_kernel, total_rows=M),
        out_shape=jax.ShapeDtypeStruct((1, 1), jnp.float32),
        grid=(M // tm,),
        in_specs=[pl.BlockSpec((tm, V), lambda i: (i, 0)),
                  pl.BlockSpec((tm, 1), lambda i: (i, 0))],
        out_specs=pl.BlockSpec((1, 1), lambda i: (0, 0)),
        scratch_shapes=[pltpu.VMEM((1, 1), jnp.float32)],
        compiler_params=_cparams("arbitrary"),
    )(logits, labels.reshape(M, 1).astype(jnp.int32))
    return out[0, 0]


# ------------------------------ parameters ----------------------------------

def init_params(key, *, num_layers, vocab_size, hidden_size, context_size,
                expand_size):
    std = 0.02
    keys = jax.random.split(key, 2 + 4 * num_layers)
    ki = iter(keys)

    def nrm(k, shape, s=std):
        return s * jax.random.normal(k, shape, jnp.float32)

    params = {
        "vocab_embed": nrm(next(ki), (vocab_size, hidden_size)),
        "pos_embed": nrm(next(ki), (context_size, hidden_size)),
        "head_ln_g": jnp.ones((hidden_size,), jnp.float32),
        "head_ln_b": jnp.zeros((hidden_size,), jnp.float32),
        "head_b": jnp.zeros((vocab_size,), jnp.float32),   # head weight is tied
        "blocks": [],
    }
    for _ in range(num_layers):
        params["blocks"].append({
            "ln1_g": jnp.ones((hidden_size,), jnp.float32),
            "ln1_b": jnp.zeros((hidden_size,), jnp.float32),
            "wqkv": nrm(next(ki), (3 * hidden_size, hidden_size)),  # (out, in)
            "bqkv": jnp.zeros((3 * hidden_size,), jnp.float32),
            "wo": nrm(next(ki), (hidden_size, hidden_size)),
            "bo": jnp.zeros((hidden_size,), jnp.float32),
            "ln2_g": jnp.ones((hidden_size,), jnp.float32),
            "ln2_b": jnp.zeros((hidden_size,), jnp.float32),
            "fc1_w": nrm(next(ki), (expand_size, hidden_size)),
            "fc1_b": jnp.zeros((expand_size,), jnp.float32),
            "fc2_w": nrm(next(ki), (hidden_size, expand_size)),
            "fc2_b": jnp.zeros((hidden_size,), jnp.float32),
        })
    return params


# ------------------------------ forward pass --------------------------------

def gpt_forward(params, tokens, *, num_heads):
    B, S = tokens.shape
    H = params["vocab_embed"].shape[1]
    hd = H // num_heads
    scale = 1.0 / math.sqrt(hd)
    M = B * S

    # Embedding gathers kept as plain-JAX glue (data-dependent gather);
    # embed_drop is identity in eval mode.
    tok = jnp.take(params["vocab_embed"], tokens, axis=0)        # (B, S, H)
    x = (tok + params["pos_embed"][None, :S]).reshape(M, H)      # (B*S, H)

    for blk in params["blocks"]:
        # --- attention sub-block:  x += out_proj(attn(qkv(norm1(x)))) ---
        qkv = ln_linear(x, blk["ln1_g"], blk["ln1_b"], blk["wqkv"], blk["bqkv"])
        attn = causal_attention(qkv.reshape(B, S, 3 * H),
                                num_heads=num_heads, scale=scale)
        x = linear_residual(attn.reshape(M, H), blk["wo"], blk["bo"], x)

        # --- ffn sub-block:  x += fc2(gelu(fc1(norm2(x)))) ---
        x = ln_ffn_residual(x, blk["ln2_g"], blk["ln2_b"],
                            blk["fc1_w"], blk["fc1_b"],
                            blk["fc2_w"], blk["fc2_b"])

    # head_norm + tied LM head (weight = vocab_embed, torch (V, H) layout)
    logits = ln_linear(x, params["head_ln_g"], params["head_ln_b"],
                       params["vocab_embed"], params["head_b"])
    return logits.reshape(B, S, -1)


def gpt_for_causal_lm(params, x, *, num_heads):
    inputs = x[:, :-1]
    labels = x[:, 1:]
    logits = gpt_forward(params, inputs, num_heads=num_heads)
    B, S, V = logits.shape
    loss = cross_entropy(logits.reshape(B * S, V), labels.reshape(B * S))
    return {"logits": logits, "loss": loss}


# ---------------------------------- main -------------------------------------

if __name__ == "__main__":
    num_layers = 2
    vocab_size = 64
    hidden_size = 32
    num_heads = 4
    context_size = 16
    expand_size = 64

    key = jax.random.PRNGKey(0)
    pkey, dkey = jax.random.split(key)
    params = init_params(pkey, num_layers=num_layers, vocab_size=vocab_size,
                         hidden_size=hidden_size, context_size=context_size,
                         expand_size=expand_size)

    B, seq_plus_1 = 2, 9   # inputs/labels have length 8 (<= context_size)
    x = jax.random.randint(dkey, (B, seq_plus_1), 0, vocab_size, dtype=jnp.int32)

    fwd = jax.jit(partial(gpt_for_causal_lm, num_heads=num_heads))
    out = fwd(params, x)
    jax.block_until_ready(out["logits"])
    jax.block_until_ready(out["loss"])

    assert out["logits"].shape == (B, seq_plus_1 - 1, vocab_size)
    assert bool(jnp.isfinite(out["loss"]))
    print("KERNEL_OK")
</pallas_src>

<mosaic_0001>
module attributes {stable_mosaic.version = 11 : i64} {
  func.func @_linear_residual_kernel(%arg0: i32, %arg1: i32, %arg2: memref<16x32xf32, #tpu.memory_space<vmem>>, %arg3: memref<32x32xf32, #tpu.memory_space<vmem>>, %arg4: memref<1x32xf32, #tpu.memory_space<vmem>>, %arg5: memref<16x32xf32, #tpu.memory_space<vmem>>, %arg6: memref<16x32xf32, #tpu.memory_space<vmem>>) attributes {dimension_semantics = [#tpu.dimension_semantics<parallel>, #tpu.dimension_semantics<parallel>], iteration_bounds = array<i64: 1, 1>, scalar_prefetch = 0 : i64, scratch_operands = 0 : i64, tpu.core_type = #tpu.core_type<tc>, window_params = [{transform_indices = @transform_0, window_bounds = array<i64: 16, 32>}, {transform_indices = @transform_1, window_bounds = array<i64: 32, 32>}, {transform_indices = @transform_2, window_bounds = array<i64: 1, 32>}, {transform_indices = @transform_3, window_bounds = array<i64: 16, 32>}, {transform_indices = @transform_4, window_bounds = array<i64: 16, 32>}]} {
    %c0 = arith.constant 0 : index
    %c0_0 = arith.constant 0 : index
    %0 = vector.load %arg2[%c0, %c0_0] : memref<16x32xf32, #tpu.memory_space<vmem>>, vector<16x32xf32>
    %1 = arith.truncf %0 : vector<16x32xf32> to vector<16x32xbf16>
    %c0_1 = arith.constant 0 : index
    %c0_2 = arith.constant 0 : index
    %2 = vector.load %arg3[%c0_1, %c0_2] : memref<32x32xf32, #tpu.memory_space<vmem>>, vector<32x32xf32>
    %3 = arith.truncf %2 : vector<32x32xf32> to vector<32x32xbf16>
    %cst = arith.constant dense<0.000000e+00> : vector<16x32xf32>
    %4 = tpu.matmul %1, %3, %cst {dimension_numbers = #tpu.dot_dimension_numbers<[1], [1], [0], [0], [0, 0, 1, 0], [], []>} : vector<16x32xbf16>, vector<32x32xbf16>, vector<16x32xf32> -> vector<16x32xf32>
    %c0_3 = arith.constant 0 : index
    %c0_4 = arith.constant 0 : index
    %5 = vector.load %arg5[%c0_3, %c0_4] : memref<16x32xf32, #tpu.memory_space<vmem>>, vector<16x32xf32>
    %6 = arith.addf %5, %4 : vector<16x32xf32>
    %c0_5 = arith.constant 0 : index
    %c0_6 = arith.constant 0 : index
    %7 = vector.load %arg4[%c0_5, %c0_6] : memref<1x32xf32, #tpu.memory_space<vmem>>, vector<1x32xf32>
    %8 = vector.broadcast %7 : vector<1x32xf32> to vector<16x32xf32>
    %9 = arith.addf %6, %8 : vector<16x32xf32>
    %c0_7 = arith.constant 0 : index
    %c0_8 = arith.constant 0 : index
    %10 = vector.load %arg6[%c0_7, %c0_8] : memref<16x32xf32, #tpu.memory_space<vmem>>, vector<16x32xf32>
    tpu.vector_store %arg6[%c0_7, %c0_8], %9 {strides = array<i32>} : memref<16x32xf32, #tpu.memory_space<vmem>>, vector<16x32xf32>,
    return
  }
  func.func @transform_0(%arg0: i32, %arg1: i32) -> (i32, i32) {
    %c0_i32 = arith.constant 0 : i32
    %c0_i32_0 = arith.constant 0 : i32
    return %arg0, %c0_i32 : i32, i32
  }
  func.func @transform_1(%arg0: i32, %arg1: i32) -> (i32, i32) {
    %c0_i32 = arith.constant 0 : i32
    %c0_i32_0 = arith.constant 0 : i32
    return %arg1, %c0_i32 : i32, i32
  }
  func.func @transform_2(%arg0: i32, %arg1: i32) -> (i32, i32) {
    %c0_i32 = arith.constant 0 : i32
    %c0_i32_0 = arith.constant 0 : i32
    return %c0_i32, %arg1 : i32, i32
  }
  func.func @transform_3(%arg0: i32, %arg1: i32) -> (i32, i32) {
    %c0_i32 = arith.constant 0 : i32
    return %arg0, %arg1 : i32, i32
  }
  func.func @transform_4(%arg0: i32, %arg1: i32) -> (i32, i32) {
    %c0_i32 = arith.constant 0 : i32
    return %arg0, %arg1 : i32, i32
  }
}

module attributes {stable_mosaic.version = 11 : i64} {
  func.func @_attn_kernel(%arg0: i32, %arg1: memref<1x8x96xf32, #tpu.memory_space<vmem>>, %arg2: memref<1x8x32xf32, #tpu.memory_space<vmem>>) attributes {dimension_semantics = [#tpu.dimension_semantics<parallel>], iteration_bounds = array<i64: 2>, scalar_prefetch = 0 : i64, scratch_operands = 0 : i64, tpu.core_type = #tpu.core_type<tc>, window_params = [{transform_indices = @transform_0, window_bounds = array<i64: 1, 8, 96>}, {transform_indices = @transform_1, window_bounds = array<i64: 1, 8, 32>}]} {
    %0 = tpu.iota {dimensions = array<i32: 0>} : vector<8x8xi32>
    %1 = tpu.iota {dimensions = array<i32: 1>} : vector<8x8xi32>
    %2 = arith.cmpi sle, %1, %0 : vector<8x8xi32>
    %c0 = arith.constant 0 : index
    %c0_0 = arith.constant 0 : index
    %c0_1 = arith.constant 0 : index
    %3 = vector.load %arg1[%c0, %c0_0, %c0_1] : memref<1x8x96xf32, #tpu.memory_space<vmem>>, vector<1x8x8xf32>
    %4 = vector.shape_cast %3 : vector<1x8x8xf32> to vector<8x8xf32>
    %c0_2 = arith.constant 0 : index
    %c0_3 = arith.constant 0 : index
    %c32 = arith.constant 32 : index
    %5 = vector.load %arg1[%c0_2, %c0_3, %c32] : memref<1x8x96xf32, #tpu.memory_space<vmem>>, vector<1x8x8xf32>
    %6 = vector.shape_cast %5 : vector<1x8x8xf32> to vector<8x8xf32>
    %c0_4 = arith.constant 0 : index
    %c0_5 = arith.constant 0 : index
    %c64 = arith.constant 64 : index
    %7 = vector.load %arg1[%c0_4, %c0_5, %c64] : memref<1x8x96xf32, #tpu.memory_space<vmem>>, vector<1x8x8xf32>
    %8 = vector.shape_cast %7 : vector<1x8x8xf32> to vector<8x8xf32>
    %9 = arith.truncf %4 : vector<8x8xf32> to vector<8x8xbf16>
    %10 = arith.truncf %6 : vector<8x8xf32> to vector<8x8xbf16>
    %cst = arith.constant dense<0.000000e+00> : vector<8x8xf32>
    %11 = tpu.matmul %9, %10, %cst {dimension_numbers = #tpu.dot_dimension_numbers<[1], [1], [0], [0], [0, 0, 1, 0], [], []>} : vector<8x8xbf16>, vector<8x8xbf16>, vector<8x8xf32> -> vector<8x8xf32>
    %cst_6 = arith.constant 0.353553385 : f32
    %12 = vector.broadcast %cst_6 : f32 to vector<8x8xf32>
    %13 = arith.mulf %11, %12 : vector<8x8xf32>
    %cst_7 = arith.constant -1.000000e+30 : f32
    %14 = vector.broadcast %cst_7 : f32 to vector<8x8xf32>
    %15 = arith.select %2, %13, %14 : vector<8x8xi1>, vector<8x8xf32>
    %cst_8 = arith.constant dense<0xFF800000> : vector<8xf32>
    %16 = vector.multi_reduction <maximumf>, %15, %cst_8 [1] : vector<8x8xf32> to vector<8xf32>
    %17 = vector.shape_cast %16 : vector<8xf32> to vector<8x1xf32>
    %18 = vector.broadcast %17 : vector<8x1xf32> to vector<8x8xf32>
    %19 = arith.subf %15, %18 : vector<8x8xf32>
    %20 = math.exp %19 : vector<8x8xf32>
    %cst_9 = arith.constant dense<0.000000e+00> : vector<8xf32>
    %21 = vector.multi_reduction <add>, %20, %cst_9 [1] : vector<8x8xf32> to vector<8xf32>
    %22 = vector.shape_cast %21 : vector<8xf32> to vector<8x1xf32>
    %23 = tpu.reciprocal %22 {approx = true} : vector<8x1xf32> -> vector<8x1xf32>
    %24 = vector.broadcast %23 : vector<8x1xf32> to vector<8x8xf32>
    %25 = arith.mulf %20, %24 : vector<8x8xf32>
    %26 = arith.truncf %25 : vector<8x8xf32> to vector<8x8xbf16>
    %27 = arith.truncf %8 : vector<8x8xf32> to vector<8x8xbf16>
    %cst_10 = arith.constant dense<0.000000e+00> : vector<8x8xf32>
    %28 = tpu.matmul %26, %27, %cst_10 {dimension_numbers = #tpu.dot_dimension_numbers<[1], [0], [0], [1], [0, 0, 1, 1], [], []>} : vector<8x8xbf16>, vector<8x8xbf16>, vector<8x8xf32> -> vector<8x8xf32>
    %c0_11 = arith.constant 0 : index
    %c0_12 = arith.constant 0 : index
    %c8 = arith.constant 8 : index
    %29 = vector.load %arg1[%c0_11, %c0_12, %c8] : memref<1x8x96xf32, #tpu.memory_space<vmem>>, vector<1x8x8xf32>
    %30 = vector.shape_cast %29 : vector<1x8x8xf32> to vector<8x8xf32>
    %c0_13 = arith.constant 0 : index
    %c0_14 = arith.constant 0 : index
    %c40 = arith.constant 40 : index
    %31 = vector.load %arg1[%c0_13, %c0_14, %c40] : memref<1x8x96xf32, #tpu.memory_space<vmem>>, vector<1x8x8xf32>
    %32 = vector.shape_cast %31 : vector<1x8x8xf32> to vector<8x8xf32>
    %c0_15 = arith.constant 0 : index
    %c0_16 = arith.constant 0 : index
    %c72 = arith.constant 72 : index
    %33 = vector.load %arg1[%c0_15, %c0_16, %c72] : memref<1x8x96xf32, #tpu.memory_space<vmem>>, vector<1x8x8xf32>
    %34 = vector.shape_cast %33 : vector<1x8x8xf32> to vector<8x8xf32>
    %35 = arith.truncf %30 : vector<8x8xf32> to vector<8x8xbf16>
    %36 = arith.truncf %32 : vector<8x8xf32> to vector<8x8xbf16>
    %cst_17 = arith.constant dense<0.000000e+00> : vector<8x8xf32>
    %37 = tpu.matmul %35, %36, %cst_17 {dimension_numbers = #tpu.dot_dimension_numbers<[1], [1], [0], [0], [0, 0, 1, 0], [], []>} : vector<8x8xbf16>, vector<8x8xbf16>, vector<8x8xf32> -> vector<8x8xf32>
    %cst_18 = arith.constant 0.353553385 : f32
    %38 = vector.broadcast %cst_18 : f32 to vector<8x8xf32>
    %39 = arith.mulf %37, %38 : vector<8x8xf32>
    %cst_19 = arith.constant -1.000000e+30 : f32
    %40 = vector.broadcast %cst_19 : f32 to vector<8x8xf32>
    %41 = arith.select %2, %39, %40 : vector<8x8xi1>, vector<8x8xf32>
    %cst_20 = arith.constant dense<0xFF800000> : vector<8xf32>
    %42 = vector.multi_reduction <maximumf>, %41, %cst_20 [1] : vector<8x8xf32> to vector<8xf32>
    %43 = vector.shape_cast %42 : vector<8xf32> to vector<8x1xf32>
    %44 = vector.broadcast %43 : vector<8x1xf32> to vector<8x8xf32>
    %45 = arith.subf %41, %44 : vector<8x8xf32>
    %46 = math.exp %45 : vector<8x8xf32>
    %cst_21 = arith.constant dense<0.000000e+00> : vector<8xf32>
    %47 = vector.multi_reduction <add>, %46, %cst_21 [1] : vector<8x8xf32> to vector<8xf32>
    %48 = vector.shape_cast %47 : vector<8xf32> to vector<8x1xf32>
    %49 = tpu.reciprocal %48 {approx = true} : vector<8x1xf32> -> vector<8x1xf32>
    %50 = vector.broadcast %49 : vector<8x1xf32> to vector<8x8xf32>
    %51 = arith.mulf %46, %50 : vector<8x8xf32>
    %52 = arith.truncf %51 : vector<8x8xf32> to vector<8x8xbf16>
    %53 = arith.truncf %34 : vector<8x8xf32> to vector<8x8xbf16>
    %cst_22 = arith.constant dense<0.000000e+00> : vector<8x8xf32>
    %54 = tpu.matmul %52, %53, %cst_22 {dimension_numbers = #tpu.dot_dimension_numbers<[1], [0], [0], [1], [0, 0, 1, 1], [], []>} : vector<8x8xbf16>, vector<8x8xbf16>, vector<8x8xf32> -> vector<8x8xf32>
    %c0_23 = arith.constant 0 : index
    %c0_24 = arith.constant 0 : index
    %c16 = arith.constant 16 : index
    %55 = vector.load %arg1[%c0_23, %c0_24, %c16] : memref<1x8x96xf32, #tpu.memory_space<vmem>>, vector<1x8x8xf32>
    %56 = vector.shape_cast %55 : vector<1x8x8xf32> to vector<8x8xf32>
    %c0_25 = arith.constant 0 : index
    %c0_26 = arith.constant 0 : index
    %c48 = arith.constant 48 : index
    %57 = vector.load %arg1[%c0_25, %c0_26, %c48] : memref<1x8x96xf32, #tpu.memory_space<vmem>>, vector<1x8x8xf32>
    %58 = vector.shape_cast %57 : vector<1x8x8xf32> to vector<8x8xf32>
    %c0_27 = arith.constant 0 : index
    %c0_28 = arith.constant 0 : index
    %c80 = arith.constant 80 : index
    %59 = vector.load %arg1[%c0_27, %c0_28, %c80] : memref<1x8x96xf32, #tpu.memory_space<vmem>>, vector<1x8x8xf32>
    %60 = vector.shape_cast %59 : vector<1x8x8xf32> to vector<8x8xf32>
    %61 = arith.truncf %56 : vector<8x8xf32> to vector<8x8xbf16>
    %62 = arith.truncf %58 : vector<8x8xf32> to vector<8x8xbf16>
    %cst_29 = arith.constant dense<0.000000e+00> : vector<8x8xf32>
    %63 = tpu.matmul %61, %62, %cst_29 {dimension_numbers = #tpu.dot_dimension_numbers<[1], [1], [0], [0], [0, 0, 1, 0], [], []>} : vector<8x8xbf16>, vector<8x8xbf16>, vector<8x8xf32> -> vector<8x8xf32>
    %cst_30 = arith.constant 0.353553385 : f32
    %64 = vector.broadcast %cst_30 : f32 to vector<8x8xf32>
    %65 = arith.mulf %63, %64 : vector<8x8xf32>
    %cst_31 = arith.constant -1.000000e+30 : f32
    %66 = vector.broadcast %cst_31 : f32 to vector<8x8xf32>
    %67 = arith.select %2, %65, %66 : vector<8x8xi1>, vector<8x8xf32>
    %cst_32 = arith.constant dense<0xFF800000> : vector<8xf32>
    %68 = vector.multi_reduction <maximumf>, %67, %cst_32 [1] : vector<8x8xf32> to vector<8xf32>
    %69 = vector.shape_cast %68 : vector<8xf32> to vector<8x1xf32>
    %70 = vector.broadcast %69 : vector<8x1xf32> to vector<8x8xf32>
    %71 = arith.subf %67, %70 : vector<8x8xf32>
    %72 = math.exp %71 : vector<8x8xf32>
    %cst_33 = arith.constant dense<0.000000e+00> : vector<8xf32>
    %73 = vector.multi_reduction <add>, %72, %cst_33 [1] : vector<8x8xf32> to vector<8xf32>
    %74 = vector.shape_cast %73 : vector<8xf32> to vector<8x1xf32>
    %75 = tpu.reciprocal %74 {approx = true} : vector<8x1xf32> -> vector<8x1xf32>
    %76 = vector.broadcast %75 : vector<8x1xf32> to vector<8x8xf32>
    %77 = arith.mulf %72, %76 : vector<8x8xf32>
    %78 = arith.truncf %77 : vector<8x8xf32> to vector<8x8xbf16>
    %79 = arith.truncf %60 : vector<8x8xf32> to vector<8x8xbf16>
    %cst_34 = arith.constant dense<0.000000e+00> : vector<8x8xf32>
    %80 = tpu.matmul %78, %79, %cst_34 {dimension_numbers = #tpu.dot_dimension_numbers<[1], [0], [0], [1], [0, 0, 1, 1], [], []>} : vector<8x8xbf16>, vector<8x8xbf16>, vector<8x8xf32> -> vector<8x8xf32>
    %c0_35 = arith.constant 0 : index
    %c0_36 = arith.constant 0 : index
    %c24 = arith.constant 24 : index
    %81 = vector.load %arg1[%c0_35, %c0_36, %c24] : memref<1x8x96xf32, #tpu.memory_space<vmem>>, vector<1x8x8xf32>
    %82 = vector.shape_cast %81 : vector<1x8x8xf32> to vector<8x8xf32>
    %c0_37 = arith.constant 0 : index
    %c0_38 = arith.constant 0 : index
    %c56 = arith.constant 56 : index
    %83 = vector.load %arg1[%c0_37, %c0_38, %c56] : memref<1x8x96xf32, #tpu.memory_space<vmem>>, vector<1x8x8xf32>
    %84 = vector.shape_cast %83 : vector<1x8x8xf32> to vector<8x8xf32>
    %c0_39 = arith.constant 0 : index
    %c0_40 = arith.constant 0 : index
    %c88 = arith.constant 88 : index
    %85 = vector.load %arg1[%c0_39, %c0_40, %c88] : memref<1x8x96xf32, #tpu.memory_space<vmem>>, vector<1x8x8xf32>
    %86 = vector.shape_cast %85 : vector<1x8x8xf32> to vector<8x8xf32>
    %87 = arith.truncf %82 : vector<8x8xf32> to vector<8x8xbf16>
    %88 = arith.truncf %84 : vector<8x8xf32> to vector<8x8xbf16>
    %cst_41 = arith.constant dense<0.000000e+00> : vector<8x8xf32>
    %89 = tpu.matmul %87, %88, %cst_41 {dimension_numbers = #tpu.dot_dimension_numbers<[1], [1], [0], [0], [0, 0, 1, 0], [], []>} : vector<8x8xbf16>, vector<8x8xbf16>, vector<8x8xf32> -> vector<8x8xf32>
    %cst_42 = arith.constant 0.353553385 : f32
    %90 = vector.broadcast %cst_42 : f32 to vector<8x8xf32>
    %91 = arith.mulf %89, %90 : vector<8x8xf32>
    %cst_43 = arith.constant -1.000000e+30 : f32
    %92 = vector.broadcast %cst_43 : f32 to vector<8x8xf32>
    %93 = arith.select %2, %91, %92 : vector<8x8xi1>, vector<8x8xf32>
    %cst_44 = arith.constant dense<0xFF800000> : vector<8xf32>
    %94 = vector.multi_reduction <maximumf>, %93, %cst_44 [1] : vector<8x8xf32> to vector<8xf32>
    %95 = vector.shape_cast %94 : vector<8xf32> to vector<8x1xf32>
    %96 = vector.broadcast %95 : vector<8x1xf32> to vector<8x8xf32>
    %97 = arith.subf %93, %96 : vector<8x8xf32>
    %98 = math.exp %97 : vector<8x8xf32>
    %cst_45 = arith.constant dense<0.000000e+00> : vector<8xf32>
    %99 = vector.multi_reduction <add>, %98, %cst_45 [1] : vector<8x8xf32> to vector<8xf32>
    %100 = vector.shape_cast %99 : vector<8xf32> to vector<8x1xf32>
    %101 = tpu.reciprocal %100 {approx = true} : vector<8x1xf32> -> vector<8x1xf32>
    %102 = vector.broadcast %101 : vector<8x1xf32> to vector<8x8xf32>
    %103 = arith.mulf %98, %102 : vector<8x8xf32>
    %104 = arith.truncf %103 : vector<8x8xf32> to vector<8x8xbf16>
    %105 = arith.truncf %86 : vector<8x8xf32> to vector<8x8xbf16>
    %cst_46 = arith.constant dense<0.000000e+00> : vector<8x8xf32>
    %106 = tpu.matmul %104, %105, %cst_46 {dimension_numbers = #tpu.dot_dimension_numbers<[1], [0], [0], [1], [0, 0, 1, 1], [], []>} : vector<8x8xbf16>, vector<8x8xbf16>, vector<8x8xf32> -> vector<8x8xf32>
    %107 = tpu.concatenate %28, %54, %80, %106 in 1 : vector<8x8xf32>, vector<8x8xf32>, vector<8x8xf32>, vector<8x8xf32> -> vector<8x32xf32>
    %c0_47 = arith.constant 0 : index
    %c0_48 = arith.constant 0 : index
    %c0_49 = arith.constant 0 : index
    %108 = vector.load %arg2[%c0_47, %c0_48, %c0_49] : memref<1x8x32xf32, #tpu.memory_space<vmem>>, vector<1x8x32xf32>
    %109 = vector.shape_cast %108 : vector<1x8x32xf32> to vector<8x32xf32>
    %110 = vector.shape_cast %107 : vector<8x32xf32> to vector<1x8x32xf32>
    tpu.vector_store %arg2[%c0_47, %c0_48, %c0_49], %110 {strides = array<i32>} : memref<1x8x32xf32, #tpu.memory_space<vmem>>, vector<1x8x32xf32>,
    return
  }
  func.func @transform_0(%arg0: i32) -> (i32, i32, i32) {
    %c0_i32 = arith.constant 0 : i32
    %c0_i32_0 = arith.constant 0 : i32
    %c0_i32_1 = arith.constant 0 : i32
    return %arg0, %c0_i32, %c0_i32_0 : i32, i32, i32
  }
  func.func @transform_1(%arg0: i32) -> (i32, i32, i32) {
    %c0_i32 = arith.constant 0 : i32
    %c0_i32_0 = arith.constant 0 : i32
    %c0_i32_1 = arith.constant 0 : i32
    return %arg0, %c0_i32, %c0_i32_0 : i32, i32, i32
  }
}

module attributes {stable_mosaic.version = 11 : i64} {
  func.func @_ln_linear_kernel(%arg0: i32, %arg1: i32, %arg2: memref<16x32xf32, #tpu.memory_space<vmem>>, %arg3: memref<1x32xf32, #tpu.memory_space<vmem>>, %arg4: memref<1x32xf32, #tpu.memory_space<vmem>>, %arg5: memref<96x32xf32, #tpu.memory_space<vmem>>, %arg6: memref<1x96xf32, #tpu.memory_space<vmem>>, %arg7: memref<16x96xf32, #tpu.memory_space<vmem>>, %arg8: memref<16x32xbf16, #tpu.memory_space<vmem>>) attributes {dimension_semantics = [#tpu.dimension_semantics<parallel>, #tpu.dimension_semantics<arbitrary>], iteration_bounds = array<i64: 1, 1>, scalar_prefetch = 0 : i64, scratch_operands = 1 : i64, tpu.core_type = #tpu.core_type<tc>, window_params = [{transform_indices = @transform_0, window_bounds = array<i64: 16, 32>}, {pipeline_mode = #tpu.pipeline_mode<synchronous>, transform_indices = @transform_1, window_bounds = array<i64: 1, 32>}, {pipeline_mode = #tpu.pipeline_mode<synchronous>, transform_indices = @transform_2, window_bounds = array<i64: 1, 32>}, {transform_indices = @transform_3, window_bounds = array<i64: 96, 32>}, {transform_indices = @transform_4, window_bounds = array<i64: 1, 96>}, {transform_indices = @transform_5, window_bounds = array<i64: 16, 96>}]} {
    %c0_i32 = arith.constant 0 : i32
    %0 = arith.cmpi eq, %arg1, %c0_i32 : i32
    %1 = arith.extui %0 : i1 to i32
    %c0_i32_0 = arith.constant 0 : i32
    %2 = arith.cmpi ne, %1, %c0_i32_0 : i32
    scf.if %2 {
      %c0_8 = arith.constant 0 : index
      %c0_9 = arith.constant 0 : index
      %11 = vector.load %arg2[%c0_8, %c0_9] : memref<16x32xf32, #tpu.memory_space<vmem>>, vector<16x32xf32>
      %c0_10 = arith.constant 0 : index
      %c0_11 = arith.constant 0 : index
      %12 = vector.load %arg3[%c0_10, %c0_11] : memref<1x32xf32, #tpu.memory_space<vmem>>, vector<1x32xf32>
      %c0_12 = arith.constant 0 : index
      %c0_13 = arith.constant 0 : index
      %13 = vector.load %arg4[%c0_12, %c0_13] : memref<1x32xf32, #tpu.memory_space<vmem>>, vector<1x32xf32>
      %cst_14 = arith.constant dense<0.000000e+00> : vector<16xf32>
      %14 = vector.multi_reduction <add>, %11, %cst_14 [1] : vector<16x32xf32> to vector<16xf32>
      %15 = vector.shape_cast %14 : vector<16xf32> to vector<16x1xf32>
      %cst_15 = arith.constant 3.200000e+01 : f32
      %16 = vector.broadcast %cst_15 : f32 to vector<16x1xf32>
      %17 = arith.divf %15, %16 : vector<16x1xf32>
      %18 = vector.broadcast %17 : vector<16x1xf32> to vector<16x32xf32>
      %19 = arith.subf %11, %18 : vector<16x32xf32>
      %20 = arith.mulf %19, %19 : vector<16x32xf32>
      %cst_16 = arith.constant dense<0.000000e+00> : vector<16xf32>
      %21 = vector.multi_reduction <add>, %20, %cst_16 [1] : vector<16x32xf32> to vector<16xf32>
      %22 = vector.shape_cast %21 : vector<16xf32> to vector<16x1xf32>
      %cst_17 = arith.constant 3.200000e+01 : f32
      %23 = vector.broadcast %cst_17 : f32 to vector<16x1xf32>
      %24 = arith.divf %22, %23 : vector<16x1xf32>
      %25 = vector.broadcast %17 : vector<16x1xf32> to vector<16x32xf32>
      %26 = arith.subf %11, %25 : vector<16x32xf32>
      %cst_18 = arith.constant 9.99999974E-6 : f32
      %27 = vector.broadcast %cst_18 : f32 to vector<16x1xf32>
      %28 = arith.addf %24, %27 : vector<16x1xf32>
      %29 = math.rsqrt %28 : vector<16x1xf32>
      %30 = vector.broadcast %29 : vector<16x1xf32> to vector<16x32xf32>
      %31 = arith.mulf %26, %30 : vector<16x32xf32>
      %32 = vector.broadcast %12 : vector<1x32xf32> to vector<16x32xf32>
      %33 = arith.mulf %31, %32 : vector<16x32xf32>
      %34 = vector.broadcast %13 : vector<1x32xf32> to vector<16x32xf32>
      %35 = arith.addf %33, %34 : vector<16x32xf32>
      %36 = arith.truncf %35 : vector<16x32xf32> to vector<16x32xbf16>
      %c0_19 = arith.constant 0 : index
      %c0_20 = arith.constant 0 : index
      %37 = vector.load %arg8[%c0_19, %c0_20] : memref<16x32xbf16, #tpu.memory_space<vmem>>, vector<16x32xbf16>
      tpu.vector_store %arg8[%c0_19, %c0_20], %36 {strides = array<i32>} : memref<16x32xbf16, #tpu.memory_space<vmem>>, vector<16x32xbf16>,
    } else {
    }
    %c0 = arith.constant 0 : index
    %c0_1 = arith.constant 0 : index
    %3 = vector.load %arg8[%c0, %c0_1] : memref<16x32xbf16, #tpu.memory_space<vmem>>, vector<16x32xbf16>
    %c0_2 = arith.constant 0 : index
    %c0_3 = arith.constant 0 : index
    %4 = vector.load %arg5[%c0_2, %c0_3] : memref<96x32xf32, #tpu.memory_space<vmem>>, vector<96x32xf32>
    %5 = arith.truncf %4 : vector<96x32xf32> to vector<96x32xbf16>
    %cst = arith.constant dense<0.000000e+00> : vector<16x96xf32>
    %6 = tpu.matmul %3, %5, %cst {dimension_numbers = #tpu.dot_dimension_numbers<[1], [1], [0], [0], [0, 0, 1, 0], [], []>} : vector<16x32xbf16>, vector<96x32xbf16>, vector<16x96xf32> -> vector<16x96xf32>
    %c0_4 = arith.constant 0 : index
    %c0_5 = arith.constant 0 : index
    %7 = vector.load %arg6[%c0_4, %c0_5] : memref<1x96xf32, #tpu.memory_space<vmem>>, vector<1x96xf32>
    %8 = vector.broadcast %7 : vector<1x96xf32> to vector<16x96xf32>
    %9 = arith.addf %6, %8 : vector<16x96xf32>
    %c0_6 = arith.constant 0 : index
    %c0_7 = arith.constant 0 : index
    %10 = vector.load %arg7[%c0_6, %c0_7] : memref<16x96xf32, #tpu.memory_space<vmem>>, vector<16x96xf32>
    tpu.vector_store %arg7[%c0_6, %c0_7], %9 {strides = array<i32>} : memref<16x96xf32, #tpu.memory_space<vmem>>, vector<16x96xf32>,
    return
  }
  func.func @transform_0(%arg0: i32, %arg1: i32) -> (i32, i32) {
    %c0_i32 = arith.constant 0 : i32
    %c0_i32_0 = arith.constant 0 : i32
    return %arg0, %c0_i32 : i32, i32
  }
  func.func @transform_1(%arg0: i32, %arg1: i32) -> (i32, i32) {
    %c0_i32 = arith.constant 0 : i32
    %c0_i32_0 = arith.constant 0 : i32
    %c0_i32_1 = arith.constant 0 : i32
    return %c0_i32, %c0_i32_0 : i32, i32
  }
  func.func @transform_2(%arg0: i32, %arg1: i32) -> (i32, i32) {
    %c0_i32 = arith.constant 0 : i32
    %c0_i32_0 = arith.constant 0 : i32
    %c0_i32_1 = arith.constant 0 : i32
    return %c0_i32, %c0_i32_0 : i32, i32
  }
  func.func @transform_3(%arg0: i32, %arg1: i32) -> (i32, i32) {
    %c0_i32 = arith.constant 0 : i32
    %c0_i32_0 = arith.constant 0 : i32
    return %arg1, %c0_i32 : i32, i32
  }
  func.func @transform_4(%arg0: i32, %arg1: i32) -> (i32, i32) {
    %c0_i32 = arith.constant 0 : i32
    %c0_i32_0 = arith.constant 0 : i32
    return %c0_i32, %arg1 : i32, i32
  }
  func.func @transform_5(%arg0: i32, %arg1: i32) -> (i32, i32) {
    %c0_i32 = arith.constant 0 : i32
    return %arg0, %arg1 : i32, i32
  }
}

module attributes {stable_mosaic.version = 11 : i64} {
  func.func @_ln_ffn_kernel(%arg0: i32, %arg1: i32, %arg2: memref<16x32xf32, #tpu.memory_space<vmem>>, %arg3: memref<1x32xf32, #tpu.memory_space<vmem>>, %arg4: memref<1x32xf32, #tpu.memory_space<vmem>>, %arg5: memref<64x32xf32, #tpu.memory_space<vmem>>, %arg6: memref<1x64xf32, #tpu.memory_space<vmem>>, %arg7: memref<32x64xf32, #tpu.memory_space<vmem>>, %arg8: memref<1x32xf32, #tpu.memory_space<vmem>>, %arg9: memref<16x32xf32, #tpu.memory_space<vmem>>, %arg10: memref<16x32xf32, #tpu.memory_space<vmem>>, %arg11: memref<16x32xbf16, #tpu.memory_space<vmem>>) attributes {dimension_semantics = [#tpu.dimension_semantics<parallel>, #tpu.dimension_semantics<arbitrary>], iteration_bounds = array<i64: 1, 1>, scalar_prefetch = 0 : i64, scratch_operands = 2 : i64, tpu.core_type = #tpu.core_type<tc>, window_params = [{transform_indices = @transform_0, window_bounds = array<i64: 16, 32>}, {pipeline_mode = #tpu.pipeline_mode<synchronous>, transform_indices = @transform_1, window_bounds = array<i64: 1, 32>}, {pipeline_mode = #tpu.pipeline_mode<synchronous>, transform_indices = @transform_2, window_bounds = array<i64: 1, 32>}, {transform_indices = @transform_3, window_bounds = array<i64: 64, 32>}, {transform_indices = @transform_4, window_bounds = array<i64: 1, 64>}, {transform_indices = @transform_5, window_bounds = array<i64: 32, 64>}, {pipeline_mode = #tpu.pipeline_mode<synchronous>, transform_indices = @transform_6, window_bounds = array<i64: 1, 32>}, {transform_indices = @transform_7, window_bounds = array<i64: 16, 32>}]} {
    %c0_i32 = arith.constant 0 : i32
    %0 = arith.cmpi eq, %arg1, %c0_i32 : i32
    %1 = arith.extui %0 : i1 to i32
    %c0_i32_0 = arith.constant 0 : i32
    %2 = arith.cmpi ne, %1, %c0_i32_0 : i32
    scf.if %2 {
      %c0_31 = arith.constant 0 : index
      %c0_32 = arith.constant 0 : index
      %61 = vector.load %arg2[%c0_31, %c0_32] : memref<16x32xf32, #tpu.memory_space<vmem>>, vector<16x32xf32>
      %c0_33 = arith.constant 0 : index
      %c0_34 = arith.constant 0 : index
      %62 = vector.load %arg3[%c0_33, %c0_34] : memref<1x32xf32, #tpu.memory_space<vmem>>, vector<1x32xf32>
      %c0_35 = arith.constant 0 : index
      %c0_36 = arith.constant 0 : index
      %63 = vector.load %arg4[%c0_35, %c0_36] : memref<1x32xf32, #tpu.memory_space<vmem>>, vector<1x32xf32>
      %cst_37 = arith.constant dense<0.000000e+00> : vector<16xf32>
      %64 = vector.multi_reduction <add>, %61, %cst_37 [1] : vector<16x32xf32> to vector<16xf32>
      %65 = vector.shape_cast %64 : vector<16xf32> to vector<16x1xf32>
      %cst_38 = arith.constant 3.200000e+01 : f32
      %66 = vector.broadcast %cst_38 : f32 to vector<16x1xf32>
      %67 = arith.divf %65, %66 : vector<16x1xf32>
      %68 = vector.broadcast %67 : vector<16x1xf32> to vector<16x32xf32>
      %69 = arith.subf %61, %68 : vector<16x32xf32>
      %70 = arith.mulf %69, %69 : vector<16x32xf32>
      %cst_39 = arith.constant dense<0.000000e+00> : vector<16xf32>
      %71 = vector.multi_reduction <add>, %70, %cst_39 [1] : vector<16x32xf32> to vector<16xf32>
      %72 = vector.shape_cast %71 : vector<16xf32> to vector<16x1xf32>
      %cst_40 = arith.constant 3.200000e+01 : f32
      %73 = vector.broadcast %cst_40 : f32 to vector<16x1xf32>
      %74 = arith.divf %72, %73 : vector<16x1xf32>
      %75 = vector.broadcast %67 : vector<16x1xf32> to vector<16x32xf32>
      %76 = arith.subf %61, %75 : vector<16x32xf32>
      %cst_41 = arith.constant 9.99999974E-6 : f32
      %77 = vector.broadcast %cst_41 : f32 to vector<16x1xf32>
      %78 = arith.addf %74, %77 : vector<16x1xf32>
      %79 = math.rsqrt %78 : vector<16x1xf32>
      %80 = vector.broadcast %79 : vector<16x1xf32> to vector<16x32xf32>
      %81 = arith.mulf %76, %80 : vector<16x32xf32>
      %82 = vector.broadcast %62 : vector<1x32xf32> to vector<16x32xf32>
      %83 = arith.mulf %81, %82 : vector<16x32xf32>
      %84 = vector.broadcast %63 : vector<1x32xf32> to vector<16x32xf32>
      %85 = arith.addf %83, %84 : vector<16x32xf32>
      %86 = arith.truncf %85 : vector<16x32xf32> to vector<16x32xbf16>
      %c0_42 = arith.constant 0 : index
      %c0_43 = arith.constant 0 : index
      %87 = vector.load %arg11[%c0_42, %c0_43] : memref<16x32xbf16, #tpu.memory_space<vmem>>, vector<16x32xbf16>
      tpu.vector_store %arg11[%c0_42, %c0_43], %86 {strides = array<i32>} : memref<16x32xbf16, #tpu.memory_space<vmem>>, vector<16x32xbf16>,
      %cst_44 = arith.constant 0.000000e+00 : f32
      %88 = vector.broadcast %cst_44 : f32 to vector<16x32xf32>
      %c0_45 = arith.constant 0 : index
      %c0_46 = arith.constant 0 : index
      %89 = vector.load %arg10[%c0_45, %c0_46] : memref<16x32xf32, #tpu.memory_space<vmem>>, vector<16x32xf32>
      tpu.vector_store %arg10[%c0_45, %c0_46], %88 {strides = array<i32>} : memref<16x32xf32, #tpu.memory_space<vmem>>, vector<16x32xf32>,
    } else {
    }
    %c0 = arith.constant 0 : index
    %c0_1 = arith.constant 0 : index
    %3 = vector.load %arg11[%c0, %c0_1] : memref<16x32xbf16, #tpu.memory_space<vmem>>, vector<16x32xbf16>
    %c0_2 = arith.constant 0 : index
    %c0_3 = arith.constant 0 : index
    %4 = vector.load %arg5[%c0_2, %c0_3] : memref<64x32xf32, #tpu.memory_space<vmem>>, vector<64x32xf32>
    %5 = arith.truncf %4 : vector<64x32xf32> to vector<64x32xbf16>
    %cst = arith.constant dense<0.000000e+00> : vector<16x64xf32>
    %6 = tpu.matmul %3, %5, %cst {dimension_numbers = #tpu.dot_dimension_numbers<[1], [1], [0], [0], [0, 0, 1, 0], [], []>} : vector<16x32xbf16>, vector<64x32xbf16>, vector<16x64xf32> -> vector<16x64xf32>
    %c0_4 = arith.constant 0 : index
    %c0_5 = arith.constant 0 : index
    %7 = vector.load %arg6[%c0_4, %c0_5] : memref<1x64xf32, #tpu.memory_space<vmem>>, vector<1x64xf32>
    %8 = vector.broadcast %7 : vector<1x64xf32> to vector<16x64xf32>
    %9 = arith.addf %6, %8 : vector<16x64xf32>
    %cst_6 = arith.constant 5.000000e-01 : f32
    %10 = vector.broadcast %cst_6 : f32 to vector<16x64xf32>
    %11 = arith.mulf %10, %9 : vector<16x64xf32>
    %cst_7 = arith.constant 0.707106769 : f32
    %12 = vector.broadcast %cst_7 : f32 to vector<16x64xf32>
    %13 = arith.mulf %9, %12 : vector<16x64xf32>
    %cst_8 = arith.constant 0.000000e+00 : f32
    %14 = vector.broadcast %cst_8 : f32 to vector<16x64xf32>
    %15 = arith.cmpf oge, %13, %14 : vector<16x64xf32>
    %cst_9 = arith.constant 1.000000e+00 : f32
    %cst_10 = arith.constant -1.000000e+00 : f32
    %16 = vector.broadcast %cst_9 : f32 to vector<16x64xf32>
    %17 = vector.broadcast %cst_10 : f32 to vector<16x64xf32>
    %18 = arith.select %15, %16, %17 : vector<16x64xi1>, vector<16x64xf32>
    %19 = math.absf %13 : vector<16x64xf32>
    %cst_11 = arith.constant 0.327591091 : f32
    %20 = vector.broadcast %cst_11 : f32 to vector<16x64xf32>
    %21 = arith.mulf %20, %19 : vector<16x64xf32>
    %cst_12 = arith.constant 1.000000e+00 : f32
    %22 = vector.broadcast %cst_12 : f32 to vector<16x64xf32>
    %23 = arith.addf %22, %21 : vector<16x64xf32>
    %cst_13 = arith.constant 1.000000e+00 : f32
    %24 = vector.broadcast %cst_13 : f32 to vector<16x64xf32>
    %25 = arith.divf %24, %23 : vector<16x64xf32>
    %cst_14 = arith.constant 1.06140542 : f32
    %26 = vector.broadcast %cst_14 : f32 to vector<16x64xf32>
    %27 = arith.mulf %26, %25 : vector<16x64xf32>
    %cst_15 = arith.constant -1.45315206 : f32
    %28 = vector.broadcast %cst_15 : f32 to vector<16x64xf32>
    %29 = arith.addf %27, %28 : vector<16x64xf32>
    %30 = arith.mulf %29, %25 : vector<16x64xf32>
    %cst_16 = arith.constant 1.42141378 : f32
    %31 = vector.broadcast %cst_16 : f32 to vector<16x64xf32>
    %32 = arith.addf %30, %31 : vector<16x64xf32>
    %33 = arith.mulf %32, %25 : vector<16x64xf32>
    %cst_17 = arith.constant -0.284496725 : f32
    %34 = vector.broadcast %cst_17 : f32 to vector<16x64xf32>
    %35 = arith.addf %33, %34 : vector<16x64xf32>
    %36 = arith.mulf %35, %25 : vector<16x64xf32>
    %cst_18 = arith.constant 0.254829586 : f32
    %37 = vector.broadcast %cst_18 : f32 to vector<16x64xf32>
    %38 = arith.addf %36, %37 : vector<16x64xf32>
    %39 = arith.mulf %38, %25 : vector<16x64xf32>
    %cst_19 = arith.constant 0.000000e+00 : f32
    %40 = vector.broadcast %cst_19 : f32 to vector<16x64xf32>
    %41 = arith.subf %40, %19 : vector<16x64xf32>
    %42 = arith.mulf %41, %19 : vector<16x64xf32>
    %43 = math.exp %42 : vector<16x64xf32>
    %44 = arith.mulf %39, %43 : vector<16x64xf32>
    %cst_20 = arith.constant 1.000000e+00 : f32
    %45 = vector.broadcast %cst_20 : f32 to vector<16x64xf32>
    %46 = arith.subf %45, %44 : vector<16x64xf32>
    %47 = arith.mulf %18, %46 : vector<16x64xf32>
    %cst_21 = arith.constant 1.000000e+00 : f32
    %48 = vector.broadcast %cst_21 : f32 to vector<16x64xf32>
    %49 = arith.addf %48, %47 : vector<16x64xf32>
    %50 = arith.mulf %11, %49 : vector<16x64xf32>
    %c0_22 = arith.constant 0 : index
    %c0_23 = arith.constant 0 : index
    %51 = vector.load %arg10[%c0_22, %c0_23] : memref<16x32xf32, #tpu.memory_space<vmem>>, vector<16x32xf32>
    %52 = arith.truncf %50 : vector<16x64xf32> to vector<16x64xbf16>
    %c0_24 = arith.constant 0 : index
    %c0_25 = arith.constant 0 : index
    %53 = vector.load %arg7[%c0_24, %c0_25] : memref<32x64xf32, #tpu.memory_space<vmem>>, vector<32x64xf32>
    %54 = arith.truncf %53 : vector<32x64xf32> to vector<32x64xbf16>
    %cst_26 = arith.constant dense<0.000000e+00> : vector<16x32xf32>
    %55 = tpu.matmul %52, %54, %cst_26 {dimension_numbers = #tpu.dot_dimension_numbers<[1], [1], [0], [0], [0, 0, 1, 0], [], []>} : vector<16x64xbf16>, vector<32x64xbf16>, vector<16x32xf32> -> vector<16x32xf32>
    %56 = arith.addf %51, %55 : vector<16x32xf32>
    %c0_27 = arith.constant 0 : index
    %c0_28 = arith.constant 0 : index
    %57 = vector.load %arg10[%c0_27, %c0_28] : memref<16x32xf32, #tpu.memory_space<vmem>>, vector<16x32xf32>
    tpu.vector_store %arg10[%c0_27, %c0_28], %56 {strides = array<i32>} : memref<16x32xf32, #tpu.memory_space<vmem>>, vector<16x32xf32>,
    %c0_i32_29 = arith.constant 0 : i32
    %58 = arith.cmpi eq, %arg1, %c0_i32_29 : i32
    %59 = arith.extui %58 : i1 to i32
    %c0_i32_30 = arith.constant 0 : i32
    %60 = arith.cmpi ne, %59, %c0_i32_30 : i32
    scf.if %60 {
      %c0_31 = arith.constant 0 : index
      %c0_32 = arith.constant 0 : index
      %61 = vector.load %arg2[%c0_31, %c0_32] : memref<16x32xf32, #tpu.memory_space<vmem>>, vector<16x32xf32>
      %c0_33 = arith.constant 0 : index
      %c0_34 = arith.constant 0 : index
      %62 = vector.load %arg10[%c0_33, %c0_34] : memref<16x32xf32, #tpu.memory_space<vmem>>, vector<16x32xf32>
      %63 = arith.addf %61, %62 : vector<16x32xf32>
      %c0_35 = arith.constant 0 : index
      %c0_36 = arith.constant 0 : index
      %64 = vector.load %arg8[%c0_35, %c0_36] : memref<1x32xf32, #tpu.memory_space<vmem>>, vector<1x32xf32>
      %65 = vector.broadcast %64 : vector<1x32xf32> to vector<16x32xf32>
      %66 = arith.addf %63, %65 : vector<16x32xf32>
      %c0_37 = arith.constant 0 : index
      %c0_38 = arith.constant 0 : index
      %67 = vector.load %arg9[%c0_37, %c0_38] : memref<16x32xf32, #tpu.memory_space<vmem>>, vector<16x32xf32>
      tpu.vector_store %arg9[%c0_37, %c0_38], %66 {strides = array<i32>} : memref<16x32xf32, #tpu.memory_space<vmem>>, vector<16x32xf32>,
    } else {
    }
    return
  }
  func.func @transform_0(%arg0: i32, %arg1: i32) -> (i32, i32) {
    %c0_i32 = arith.constant 0 : i32
    %c0_i32_0 = arith.constant 0 : i32
    return %arg0, %c0_i32 : i32, i32
  }
  func.func @transform_1(%arg0: i32, %arg1: i32) -> (i32, i32) {
    %c0_i32 = arith.constant 0 : i32
    %c0_i32_0 = arith.constant 0 : i32
    %c0_i32_1 = arith.constant 0 : i32
    return %c0_i32, %c0_i32_0 : i32, i32
  }
  func.func @transform_2(%arg0: i32, %arg1: i32) -> (i32, i32) {
    %c0_i32 = arith.constant 0 : i32
    %c0_i32_0 = arith.constant 0 : i32
    %c0_i32_1 = arith.constant 0 : i32
    return %c0_i32, %c0_i32_0 : i32, i32
  }
  func.func @transform_3(%arg0: i32, %arg1: i32) -> (i32, i32) {
    %c0_i32 = arith.constant 0 : i32
    %c0_i32_0 = arith.constant 0 : i32
    return %arg1, %c0_i32 : i32, i32
  }
  func.func @transform_4(%arg0: i32, %arg1: i32) -> (i32, i32) {
    %c0_i32 = arith.constant 0 : i32
    %c0_i32_0 = arith.constant 0 : i32
    return %c0_i32, %arg1 : i32, i32
  }
  func.func @transform_5(%arg0: i32, %arg1: i32) -> (i32, i32) {
    %c0_i32 = arith.constant 0 : i32
    %c0_i32_0 = arith.constant 0 : i32
    return %c0_i32, %arg1 : i32, i32
  }
  func.func @transform_6(%arg0: i32, %arg1: i32) -> (i32, i32) {
    %c0_i32 = arith.constant 0 : i32
    %c0_i32_0 = arith.constant 0 : i32
    %c0_i32_1 = arith.constant 0 : i32
    return %c0_i32, %c0_i32_0 : i32, i32
  }
  func.func @transform_7(%arg0: i32, %arg1: i32) -> (i32, i32) {
    %c0_i32 = arith.constant 0 : i32
    %c0_i32_0 = arith.constant 0 : i32
    return %arg0, %c0_i32 : i32, i32
  }
}

module attributes {stable_mosaic.version = 11 : i64} {
  func.func @_ln_linear_kernel(%arg0: i32, %arg1: i32, %arg2: memref<16x32xf32, #tpu.memory_space<vmem>>, %arg3: memref<1x32xf32, #tpu.memory_space<vmem>>, %arg4: memref<1x32xf32, #tpu.memory_space<vmem>>, %arg5: memref<64x32xf32, #tpu.memory_space<vmem>>, %arg6: memref<1x64xf32, #tpu.memory_space<vmem>>, %arg7: memref<16x64xf32, #tpu.memory_space<vmem>>, %arg8: memref<16x32xbf16, #tpu.memory_space<vmem>>) attributes {dimension_semantics = [#tpu.dimension_semantics<parallel>, #tpu.dimension_semantics<arbitrary>], iteration_bounds = array<i64: 1, 1>, scalar_prefetch = 0 : i64, scratch_operands = 1 : i64, tpu.core_type = #tpu.core_type<tc>, window_params = [{transform_indices = @transform_0, window_bounds = array<i64: 16, 32>}, {pipeline_mode = #tpu.pipeline_mode<synchronous>, transform_indices = @transform_1, window_bounds = array<i64: 1, 32>}, {pipeline_mode = #tpu.pipeline_mode<synchronous>, transform_indices = @transform_2, window_bounds = array<i64: 1, 32>}, {transform_indices = @transform_3, window_bounds = array<i64: 64, 32>}, {transform_indices = @transform_4, window_bounds = array<i64: 1, 64>}, {transform_indices = @transform_5, window_bounds = array<i64: 16, 64>}]} {
    %c0_i32 = arith.constant 0 : i32
    %0 = arith.cmpi eq, %arg1, %c0_i32 : i32
    %1 = arith.extui %0 : i1 to i32
    %c0_i32_0 = arith.constant 0 : i32
    %2 = arith.cmpi ne, %1, %c0_i32_0 : i32
    scf.if %2 {
      %c0_8 = arith.constant 0 : index
      %c0_9 = arith.constant 0 : index
      %11 = vector.load %arg2[%c0_8, %c0_9] : memref<16x32xf32, #tpu.memory_space<vmem>>, vector<16x32xf32>
      %c0_10 = arith.constant 0 : index
      %c0_11 = arith.constant 0 : index
      %12 = vector.load %arg3[%c0_10, %c0_11] : memref<1x32xf32, #tpu.memory_space<vmem>>, vector<1x32xf32>
      %c0_12 = arith.constant 0 : index
      %c0_13 = arith.constant 0 : index
      %13 = vector.load %arg4[%c0_12, %c0_13] : memref<1x32xf32, #tpu.memory_space<vmem>>, vector<1x32xf32>
      %cst_14 = arith.constant dense<0.000000e+00> : vector<16xf32>
      %14 = vector.multi_reduction <add>, %11, %cst_14 [1] : vector<16x32xf32> to vector<16xf32>
      %15 = vector.shape_cast %14 : vector<16xf32> to vector<16x1xf32>
      %cst_15 = arith.constant 3.200000e+01 : f32
      %16 = vector.broadcast %cst_15 : f32 to vector<16x1xf32>
      %17 = arith.divf %15, %16 : vector<16x1xf32>
      %18 = vector.broadcast %17 : vector<16x1xf32> to vector<16x32xf32>
      %19 = arith.subf %11, %18 : vector<16x32xf32>
      %20 = arith.mulf %19, %19 : vector<16x32xf32>
      %cst_16 = arith.constant dense<0.000000e+00> : vector<16xf32>
      %21 = vector.multi_reduction <add>, %20, %cst_16 [1] : vector<16x32xf32> to vector<16xf32>
      %22 = vector.shape_cast %21 : vector<16xf32> to vector<16x1xf32>
      %cst_17 = arith.constant 3.200000e+01 : f32
      %23 = vector.broadcast %cst_17 : f32 to vector<16x1xf32>
      %24 = arith.divf %22, %23 : vector<16x1xf32>
      %25 = vector.broadcast %17 : vector<16x1xf32> to vector<16x32xf32>
      %26 = arith.subf %11, %25 : vector<16x32xf32>
      %cst_18 = arith.constant 9.99999974E-6 : f32
      %27 = vector.broadcast %cst_18 : f32 to vector<16x1xf32>
      %28 = arith.addf %24, %27 : vector<16x1xf32>
      %29 = math.rsqrt %28 : vector<16x1xf32>
      %30 = vector.broadcast %29 : vector<16x1xf32> to vector<16x32xf32>
      %31 = arith.mulf %26, %30 : vector<16x32xf32>
      %32 = vector.broadcast %12 : vector<1x32xf32> to vector<16x32xf32>
      %33 = arith.mulf %31, %32 : vector<16x32xf32>
      %34 = vector.broadcast %13 : vector<1x32xf32> to vector<16x32xf32>
      %35 = arith.addf %33, %34 : vector<16x32xf32>
      %36 = arith.truncf %35 : vector<16x32xf32> to vector<16x32xbf16>
      %c0_19 = arith.constant 0 : index
      %c0_20 = arith.constant 0 : index
      %37 = vector.load %arg8[%c0_19, %c0_20] : memref<16x32xbf16, #tpu.memory_space<vmem>>, vector<16x32xbf16>
      tpu.vector_store %arg8[%c0_19, %c0_20], %36 {strides = array<i32>} : memref<16x32xbf16, #tpu.memory_space<vmem>>, vector<16x32xbf16>,
    } else {
    }
    %c0 = arith.constant 0 : index
    %c0_1 = arith.constant 0 : index
    %3 = vector.load %arg8[%c0, %c0_1] : memref<16x32xbf16, #tpu.memory_space<vmem>>, vector<16x32xbf16>
    %c0_2 = arith.constant 0 : index
    %c0_3 = arith.constant 0 : index
    %4 = vector.load %arg5[%c0_2, %c0_3] : memref<64x32xf32, #tpu.memory_space<vmem>>, vector<64x32xf32>
    %5 = arith.truncf %4 : vector<64x32xf32> to vector<64x32xbf16>
    %cst = arith.constant dense<0.000000e+00> : vector<16x64xf32>
    %6 = tpu.matmul %3, %5, %cst {dimension_numbers = #tpu.dot_dimension_numbers<[1], [1], [0], [0], [0, 0, 1, 0], [], []>} : vector<16x32xbf16>, vector<64x32xbf16>, vector<16x64xf32> -> vector<16x64xf32>
    %c0_4 = arith.constant 0 : index
    %c0_5 = arith.constant 0 : index
    %7 = vector.load %arg6[%c0_4, %c0_5] : memref<1x64xf32, #tpu.memory_space<vmem>>, vector<1x64xf32>
    %8 = vector.broadcast %7 : vector<1x64xf32> to vector<16x64xf32>
    %9 = arith.addf %6, %8 : vector<16x64xf32>
    %c0_6 = arith.constant 0 : index
    %c0_7 = arith.constant 0 : index
    %10 = vector.load %arg7[%c0_6, %c0_7] : memref<16x64xf32, #tpu.memory_space<vmem>>, vector<16x64xf32>
    tpu.vector_store %arg7[%c0_6, %c0_7], %9 {strides = array<i32>} : memref<16x64xf32, #tpu.memory_space<vmem>>, vector<16x64xf32>,
    return
  }
  func.func @transform_0(%arg0: i32, %arg1: i32) -> (i32, i32) {
    %c0_i32 = arith.constant 0 : i32
    %c0_i32_0 = arith.constant 0 : i32
    return %arg0, %c0_i32 : i32, i32
  }
  func.func @transform_1(%arg0: i32, %arg1: i32) -> (i32, i32) {
    %c0_i32 = arith.constant 0 : i32
    %c0_i32_0 = arith.constant 0 : i32
    %c0_i32_1 = arith.constant 0 : i32
    return %c0_i32, %c0_i32_0 : i32, i32
  }
  func.func @transform_2(%arg0: i32, %arg1: i32) -> (i32, i32) {
    %c0_i32 = arith.constant 0 : i32
    %c0_i32_0 = arith.constant 0 : i32
    %c0_i32_1 = arith.constant 0 : i32
    return %c0_i32, %c0_i32_0 : i32, i32
  }
  func.func @transform_3(%arg0: i32, %arg1: i32) -> (i32, i32) {
    %c0_i32 = arith.constant 0 : i32
    %c0_i32_0 = arith.constant 0 : i32
    return %arg1, %c0_i32 : i32, i32
  }
  func.func @transform_4(%arg0: i32, %arg1: i32) -> (i32, i32) {
    %c0_i32 = arith.constant 0 : i32
    %c0_i32_0 = arith.constant 0 : i32
    return %c0_i32, %arg1 : i32, i32
  }
  func.func @transform_5(%arg0: i32, %arg1: i32) -> (i32, i32) {
    %c0_i32 = arith.constant 0 : i32
    return %arg0, %arg1 : i32, i32
  }
}

module attributes {stable_mosaic.version = 11 : i64} {
  func.func @_xent_kernel(%arg0: i32, %arg1: memref<16x64xf32, #tpu.memory_space<vmem>>, %arg2: memref<16x1xi32, #tpu.memory_space<vmem>>, %arg3: memref<1x1xf32, #tpu.memory_space<vmem>>, %arg4: memref<1x1xf32, #tpu.memory_space<vmem>>) attributes {dimension_semantics = [#tpu.dimension_semantics<arbitrary>], iteration_bounds = array<i64: 1>, scalar_prefetch = 0 : i64, scratch_operands = 1 : i64, tpu.core_type = #tpu.core_type<tc>, window_params = [{transform_indices = @transform_0, window_bounds = array<i64: 16, 64>}, {transform_indices = @transform_1, window_bounds = array<i64: 16, 1>}, {pipeline_mode = #tpu.pipeline_mode<synchronous>, transform_indices = @transform_2, window_bounds = array<i64: 1, 1>}]} {
    %c0_i32 = arith.constant 0 : i32
    %0 = arith.cmpi eq, %arg0, %c0_i32 : i32
    %1 = arith.extui %0 : i1 to i32
    %c0_i32_0 = arith.constant 0 : i32
    %2 = arith.cmpi ne, %1, %c0_i32_0 : i32
    scf.if %2 {
      %cst_14 = arith.constant 0.000000e+00 : f32
      %33 = vector.broadcast %cst_14 : f32 to vector<1x1xf32>
      %c0_15 = arith.constant 0 : index
      %c0_16 = arith.constant 0 : index
      %34 = vector.load %arg4[%c0_15, %c0_16] : memref<1x1xf32, #tpu.memory_space<vmem>>, vector<1x1xf32>
      tpu.vector_store %arg4[%c0_15, %c0_16], %33 {strides = array<i32>} : memref<1x1xf32, #tpu.memory_space<vmem>>, vector<1x1xf32>,
    } else {
    }
    %c0 = arith.constant 0 : index
    %c0_1 = arith.constant 0 : index
    %3 = vector.load %arg1[%c0, %c0_1] : memref<16x64xf32, #tpu.memory_space<vmem>>, vector<16x64xf32>
    %c0_2 = arith.constant 0 : index
    %c0_3 = arith.constant 0 : index
    %4 = vector.load %arg2[%c0_2, %c0_3] : memref<16x1xi32, #tpu.memory_space<vmem>>, vector<16x1xi32>
    %cst = arith.constant dense<0xFF800000> : vector<16xf32>
    %5 = vector.multi_reduction <maximumf>, %3, %cst [1] : vector<16x64xf32> to vector<16xf32>
    %6 = vector.shape_cast %5 : vector<16xf32> to vector<16x1xf32>
    %7 = vector.broadcast %6 : vector<16x1xf32> to vector<16x64xf32>
    %8 = arith.subf %3, %7 : vector<16x64xf32>
    %9 = math.exp %8 : vector<16x64xf32>
    %cst_4 = arith.constant dense<0.000000e+00> : vector<16xf32>
    %10 = vector.multi_reduction <add>, %9, %cst_4 [1] : vector<16x64xf32> to vector<16xf32>
    %11 = vector.shape_cast %10 : vector<16xf32> to vector<16x1xf32>
    %12 = math.log %11 : vector<16x1xf32>
    %13 = arith.addf %6, %12 : vector<16x1xf32>
    %14 = tpu.iota {dimensions = array<i32: 1>} : vector<16x64xi32>
    %15 = vector.broadcast %4 : vector<16x1xi32> to vector<16x64xi32>
    %16 = arith.cmpi eq, %14, %15 : vector<16x64xi32>
    %cst_5 = arith.constant 0.000000e+00 : f32
    %17 = vector.broadcast %cst_5 : f32 to vector<16x64xf32>
    %18 = arith.select %16, %3, %17 : vector<16x64xi1>, vector<16x64xf32>
    %cst_6 = arith.constant dense<0.000000e+00> : vector<16xf32>
    %19 = vector.multi_reduction <add>, %18, %cst_6 [1] : vector<16x64xf32> to vector<16xf32>
    %20 = vector.shape_cast %19 : vector<16xf32> to vector<16x1xf32>
    %c0_7 = arith.constant 0 : index
    %c0_8 = arith.constant 0 : index
    %21 = vector.load %arg4[%c0_7, %c0_8] : memref<1x1xf32, #tpu.memory_space<vmem>>, vector<1x1xf32>
    %22 = arith.subf %13, %20 : vector<16x1xf32>
    %23 = vector.shape_cast %22 : vector<16x1xf32> to vector<1x16x1xf32>
    %cst_9 = arith.constant dense<0.000000e+00> : vector<1xf32>
    %24 = vector.multi_reduction <add>, %23, %cst_9 [1, 2] : vector<1x16x1xf32> to vector<1xf32>
    %25 = vector.shape_cast %24 : vector<1xf32> to vector<1x1x1xf32>
    %26 = vector.extract %25[0, 0, 0] : f32 from vector<1x1x1xf32>
    %27 = vector.broadcast %26 : f32 to vector<1x1xf32>
    %28 = arith.addf %21, %27 : vector<1x1xf32>
    %c0_10 = arith.constant 0 : index
    %c0_11 = arith.constant 0 : index
    %29 = vector.load %arg4[%c0_10, %c0_11] : memref<1x1xf32, #tpu.memory_space<vmem>>, vector<1x1xf32>
    tpu.vector_store %arg4[%c0_10, %c0_11], %28 {strides = array<i32>} : memref<1x1xf32, #tpu.memory_space<vmem>>, vector<1x1xf32>,
    %c0_i32_12 = arith.constant 0 : i32
    %30 = arith.cmpi eq, %arg0, %c0_i32_12 : i32
    %31 = arith.extui %30 : i1 to i32
    %c0_i32_13 = arith.constant 0 : i32
    %32 = arith.cmpi ne, %31, %c0_i32_13 : i32
    scf.if %32 {
      %c0_14 = arith.constant 0 : index
      %c0_15 = arith.constant 0 : index
      %33 = vector.load %arg4[%c0_14, %c0_15] : memref<1x1xf32, #tpu.memory_space<vmem>>, vector<1x1xf32>
      %cst_16 = arith.constant 6.250000e-02 : f32
      %34 = vector.broadcast %cst_16 : f32 to vector<1x1xf32>
      %35 = arith.mulf %33, %34 : vector<1x1xf32>
      %c0_17 = arith.constant 0 : index
      %c0_18 = arith.constant 0 : index
      %36 = vector.load %arg3[%c0_17, %c0_18] : memref<1x1xf32, #tpu.memory_space<vmem>>, vector<1x1xf32>
      tpu.vector_store %arg3[%c0_17, %c0_18], %35 {strides = array<i32>} : memref<1x1xf32, #tpu.memory_space<vmem>>, vector<1x1xf32>,
    } else {
    }
    return
  }
  func.func @transform_0(%arg0: i32) -> (i32, i32) {
    %c0_i32 = arith.constant 0 : i32
    %c0_i32_0 = arith.constant 0 : i32
    return %arg0, %c0_i32 : i32, i32
  }
  func.func @transform_1(%arg0: i32) -> (i32, i32) {
    %c0_i32 = arith.constant 0 : i32
    %c0_i32_0 = arith.constant 0 : i32
    return %arg0, %c0_i32 : i32, i32
  }
  func.func @transform_2(%arg0: i32) -> (i32, i32) {
    %c0_i32 = arith.constant 0 : i32
    %c0_i32_0 = arith.constant 0 : i32
    %c0_i32_1 = arith.constant 0 : i32
    return %c0_i32, %c0_i32_0 : i32, i32
  }
}

</mosaic_0001>

<llo_original>
// kernel: gpt_for_causal_lm.10
$region0: #{gpt_for_causal_lm.10}
  #allocation0 [shape = 'u32[]', space=smem, size = 0x4, offset = 0x4, fixed_abs, tag = 'smem constant byte address 0x4 - core index']
  #allocation1 [shape = 'u32[72,128]{1,0:T(1,128)}', space=vmem, size = 0x9000, scoped, tag = 'internal scratch']
  #allocation2 [shape = 'bf16[16,32]{1,0:T(8,128)(2,1)}', space=vmem, size = 0x1000, scoped, tag = 'scratch operand']
  %s0 = inlined_call_operand.vmem [shape: f32[16,32], index: 0, kind: input, shape index: {}]
  %s1 = inlined_call_operand.vmem [shape: f32[1,32], index: 1, kind: input, shape index: {}]
  %s2 = inlined_call_operand.vmem [shape: f32[1,32], index: 2, kind: input, shape index: {}]
  %s3 = inlined_call_operand.vmem [shape: f32[96,32], index: 3, kind: input, shape index: {}]
  %s4 = inlined_call_operand.vmem [shape: f32[1,96], index: 4, kind: input, shape index: {}]
  %s5 = inlined_call_operand.vmem [shape: f32[16,96], index: 5, kind: output, shape index: {}]
  %s6 = sld [smem:[#allocation0]]
  $region34: #{gpt_for_causal_lm.10} parent=0
    _
  %s8 = ssub.s32 1, %s6
  %s9 = scalar_select 0, %s8, %s6
  // Predicated region
  $region2: #{gpt_for_causal_lm.10} parent=0 // pred_check
    _
  $region3: #{gpt_for_causal_lm.10} parent=0 // pred_check_branch
    %11 = sbr.rel (0) target = $region5
  $region4: #{gpt_for_causal_lm.10} parent=0 // pred_region
    _
  $region5: #{gpt_for_causal_lm.10} parent=0 // pred_fallthru
    _
  // Predicated region
  $region6: #{gpt_for_causal_lm.10} parent=0 // pred_check
    _
  $region7: #{gpt_for_causal_lm.10} parent=0 // pred_check_branch
    %13 = sbr.rel (0) target = $region9
  $region8: #{gpt_for_causal_lm.10} parent=0 // pred_region
    _
  $region9: #{gpt_for_causal_lm.10} parent=0 // pred_fallthru
    _
  // Predicated region
  $region10: #{gpt_for_causal_lm.10} parent=0 // pred_check
    _
  $region11: #{gpt_for_causal_lm.10} parent=0 // pred_check_branch
    %15 = sbr.rel (0) target = $region13
  $region12: #{gpt_for_causal_lm.10} parent=0 // pred_region
    _
  $region13: #{gpt_for_causal_lm.10} parent=0 // pred_fallthru
    _
  // Predicated region
  $region14: #{gpt_for_causal_lm.10} parent=0 // pred_check
    _
  $region15: #{gpt_for_causal_lm.10} parent=0 // pred_check_branch
    %17 = sbr.rel (0) target = $region17
  $region16: #{gpt_for_causal_lm.10} parent=0 // pred_region
    _
  $region17: #{gpt_for_causal_lm.10} parent=0 // pred_fallthru
    _
  // Predicated region
  $region18: #{gpt_for_causal_lm.10} parent=0 // pred_check
    _
  $region19: #{gpt_for_causal_lm.10} parent=0 // pred_check_branch
    %19 = sbr.rel (0) target = $region21
  $region20: #{gpt_for_causal_lm.10} parent=0 // pred_region
    _
  $region21: #{gpt_for_causal_lm.10} parent=0 // pred_fallthru
    _
  %p21 = scmp.eq.s32.totalorder 0, 0
  // Predicated region
  $region22: #{gpt_for_causal_lm.10} parent=0 // pred_check
    %p22 = pneg %p21
  $region23: #{gpt_for_causal_lm.10} parent=0 // pred_check_branch
    %24 = sbr.rel (%p22) target = $region25
  $region24: #{gpt_for_causal_lm.10} parent=0 // pred_region
    %v25 = vld [vmem:[%s0] sm:$0xff]
    %v26 = vld [vmem:[%s0 + $0x8] sm:$0xff]
    %v27 = vld [vmem:[%s1] sm:$0x1]
    %v28 = vld [vmem:[%s2] sm:$0x1]
    %vm29 = vcmask 261120
    %v30 = vsel %vm29, %v25, 0.0
    %31 = vadd.xlane.f32.xlu0 %v30
    %v32 = vpop.xlane.xlu0 %31
    %v33 = vsel %vm29, %v26, 0.0
    %34 = vadd.xlane.f32.xlu0 %v33
    %v35 = vpop.xlane.xlu0 %34
    %v36 = vrcp.pop 32.0
    %v37 = vmul.f32 32.0, %v36
    %v38 = vsub.f32 1.0, %v37
    %v39 = vmul.f32 %v36, %v38
    %v40 = vadd.f32 %v36, %v39
    %vm41 = vweird.f32 %v36
    %v42 = vsel %vm41, %v36, %v40
    %v43 = vmul.f32 %v32, %v42
    %v44 = vmul.f32 %v35, %v42
    %v45 = vsub.f32 %v25, %v43
    %v46 = vsub.f32 %v26, %v44
    %v47 = vmul.f32 %v45, %v45
    %v48 = vmul.f32 %v46, %v46
    %v49 = vsel %vm29, %v47, 0.0
    %50 = vadd.xlane.f32.xlu0 %v49
    %v51 = vpop.xlane.xlu0 %50
    %v52 = vsel %vm29, %v48, 0.0
    %53 = vadd.xlane.f32.xlu0 %v52
    %v54 = vpop.xlane.xlu0 %53
    %v55 = vmul.f32 %v51, %v42
    %v56 = vmul.f32 %v54, %v42
    %v57 = vadd.f32 %v55, 1e-05
    %v58 = vadd.f32 %v56, 1e-05
    %v59 = vrsqrt.pop %v57
    %v60 = vmul.f32 %v59, %v57
    %v61 = vmul.f32 %v60, %v59
    %v62 = vmul.f32 0.5, %v61
    %v63 = vsub.f32 1.5, %v62
    %v64 = vmul.f32 %v59, %v63
    %vm65 = vweird.f32 %v57
    %vm66 = vweird.f32 %v59
    %vm67 = vmor %vm65, %vm66
    %v68 = vsel %vm67, %v59, %v64
    %v69 = vrsqrt.pop %v58
    %v70 = vmul.f32 %v69, %v58
    %v71 = vmul.f32 %v70, %v69
    %v72 = vmul.f32 0.5, %v71
    %v73 = vsub.f32 1.5, %v72
    %v74 = vmul.f32 %v69, %v73
    %vm75 = vweird.f32 %v58
    %vm76 = vweird.f32 %v69
    %vm77 = vmor %vm75, %vm76
    %v78 = vsel %vm77, %v69, %v74
    %v79 = vmul.f32 %v45, %v68
    %v80 = vmul.f32 %v46, %v78
    %v82 = vperm.slane %v27, 0
    %v84 = vmul.f32 %v79, %v82
    %v85 = vmul.f32 %v80, %v82
    %v87 = vperm.slane %v28, 0
    %v89 = vadd.f32 %v84, %v87
    %v90 = vadd.f32 %v85, %v87
    %v91 = vpack.c.bf16 %v89, %v89
    %v92 = vpack.c.bf16 %v90, %v90
    %vm93 = vcmask 257024
    %94 = vst.msk [vmem:[#allocation2] sm:$0xf] %vm93, %v91
    %95 = vst.msk [vmem:[#allocation2 + $0x4] sm:$0xf] %vm93, %v92
  $region25: #{gpt_for_causal_lm.10} parent=0 // pred_fallthru
    _
  %v96 = vld [vmem:[#allocation2] sm:$0xf]
  %v97 = vld [vmem:[#allocation2 + $0x4] sm:$0xf]
  %v98 = vld [vmem:[%s3] sm:$0xff]
  %v99 = vld [vmem:[%s3 + $0x8] sm:$0xff]
  %v100 = vld [vmem:[%s3 + $0x10] sm:$0xff]
  %v101 = vld [vmem:[%s3 + $0x18] sm:$0xff]
  %v102 = vld [vmem:[%s3 + $0x20] sm:$0xff]
  %v103 = vld [vmem:[%s3 + $0x28] sm:$0xff]
  %v104 = vld [vmem:[%s3 + $0x30] sm:$0xff]
  %v105 = vld [vmem:[%s3 + $0x38] sm:$0xff]
  %v106 = vld [vmem:[%s3 + $0x40] sm:$0xff]
  %v107 = vld [vmem:[%s3 + $0x48] sm:$0xff]
  %v108 = vld [vmem:[%s3 + $0x50] sm:$0xff]
  %v109 = vld [vmem:[%s3 + $0x58] sm:$0xff]
  %v110 = vpack.c.bf16 %v99, %v98
  %v111 = vpack.c.bf16 %v101, %v100
  %v112 = vpack.c.bf16 %v103, %v102
  %v113 = vpack.c.bf16 %v105, %v104
  %v114 = vpack.c.bf16 %v107, %v106
  %v115 = vpack.c.bf16 %v109, %v108
  %v116 = vld [vmem:[%s4] sm:$0x1]
  %v118 = vperm.slane %v116, 0
  %v122 = vunpack.c.l.b16 %v96
  %v123 = vunpack.c.l.b16 %v97
  %v124 = vpack.c.b16 %v123, %v122
  %vm125 = vcmask 261120
  %v127 = vsel %vm125, %v124, 0
  %v130 = vsel %vm125, %v110, 0
  %v133 = vsel %vm125, %v111, 0
  %v136 = vsel %vm125, %v112, 0
  %v139 = vsel %vm125, %v113, 0
  %v142 = vsel %vm125, %v114, 0
  %v145 = vsel %vm125, %v115, 0
  %147 = vmatpush.bf16.xpose.msra.mxu0 0
  %148 = vmatpush.bf16.xpose.msra.mxu0 0
  %149 = vmatpush.bf16.xpose.msra.mxu0 %v145
  %150 = vmatpush.bf16.xpose.msra.mxu0 %v142
  %151 = vmatpush.bf16.xpose.msra.mxu0 %v139
  %152 = vmatpush.bf16.xpose.msra.mxu0 %v136
  %153 = vmatpush.bf16.xpose.msra.mxu0 %v133
  %154 = vmatpush.bf16.xpose.msra.mxu0 %v130
  %155 = vmatmul.bf16.gmra.mxu0 %v127
  %v156 = vpop.f32.mrf.mxu0
  %v157 = vadd.f32 %v118, %v156
  %v158 = vpop.f32.mrf.mxu0
  %v159 = vadd.f32 %v118, %v158
  %160 = vdwg.mxu0
  %vm161 = vcmask 785408
  %162 = vst.msk [vmem:[%s5] sm:$0xff] %vm161, %v157
  %163 = vst.msk [vmem:[%s5 + $0x8] sm:$0xff] %vm161, %v159
  // Predicated region
  $region26: #{gpt_for_causal_lm.10} parent=0 // pred_check
    _
  $region27: #{gpt_for_causal_lm.10} parent=0 // pred_check_branch
    %165 = sbr.rel (0) target = $region29
  $region28: #{gpt_for_causal_lm.10} parent=0 // pred_region
    _
  $region29: #{gpt_for_causal_lm.10} parent=0 // pred_fallthru
    _
  // Predicated region
  $region30: #{gpt_for_causal_lm.10} parent=0 // pred_check
    _
  $region31: #{gpt_for_causal_lm.10} parent=0 // pred_check_branch
    %167 = sbr.rel (0) target = $region33
  $region32: #{gpt_for_causal_lm.10} parent=0 // pred_region
    _
  $region33: #{gpt_for_causal_lm.10} parent=0 // pred_fallthru
    _

// kernel: gpt_for_causal_lm.12
$region0: #{gpt_for_causal_lm.12}
  #allocation0 [shape = 'u32[]', space=smem, size = 0x4, offset = 0x4, fixed_abs, tag = 'smem constant byte address 0x4 - core index']
  #allocation1 [shape = 'u32[72,128]{1,0:T(1,128)}', space=vmem, size = 0x9000, scoped, tag = 'internal scratch']
  %s0 = inlined_call_operand.vmem [shape: f32[16,32], index: 0, kind: input, shape index: {}]
  %s1 = inlined_call_operand.vmem [shape: f32[32,32], index: 1, kind: input, shape index: {}]
  %s2 = inlined_call_operand.vmem [shape: f32[1,32], index: 2, kind: input, shape index: {}]
  %s3 = inlined_call_operand.vmem [shape: f32[16,32], index: 3, kind: input, shape index: {}]
  %s4 = inlined_call_operand.vmem [shape: f32[16,32], index: 4, kind: output, shape index: {}]
  %s5 = sld [smem:[#allocation0]]
  $region26: #{gpt_for_causal_lm.12} parent=0
    _
  %s7 = ssub.s32 1, %s5
  %s8 = scalar_select 0, %s7, %s5
  // Predicated region
  $region2: #{gpt_for_causal_lm.12} parent=0 // pred_check
    _
  $region3: #{gpt_for_causal_lm.12} parent=0 // pred_check_branch
    %10 = sbr.rel (0) target = $region5
  $region4: #{gpt_for_causal_lm.12} parent=0 // pred_region
    _
  $region5: #{gpt_for_causal_lm.12} parent=0 // pred_fallthru
    _
  // Predicated region
  $region6: #{gpt_for_causal_lm.12} parent=0 // pred_check
    _
  $region7: #{gpt_for_causal_lm.12} parent=0 // pred_check_branch
    %12 = sbr.rel (0) target = $region9
  $region8: #{gpt_for_causal_lm.12} parent=0 // pred_region
    _
  $region9: #{gpt_for_causal_lm.12} parent=0 // pred_fallthru
    _
  // Predicated region
  $region10: #{gpt_for_causal_lm.12} parent=0 // pred_check
    _
  $region11: #{gpt_for_causal_lm.12} parent=0 // pred_check_branch
    %14 = sbr.rel (0) target = $region13
  $region12: #{gpt_for_causal_lm.12} parent=0 // pred_region
    _
  $region13: #{gpt_for_causal_lm.12} parent=0 // pred_fallthru
    _
  // Predicated region
  $region14: #{gpt_for_causal_lm.12} parent=0 // pred_check
    _
  $region15: #{gpt_for_causal_lm.12} parent=0 // pred_check_branch
    %16 = sbr.rel (0) target = $region17
  $region16: #{gpt_for_causal_lm.12} parent=0 // pred_region
    _
  $region17: #{gpt_for_causal_lm.12} parent=0 // pred_fallthru
    _
  %v18 = vld [vmem:[%s0] sm:$0xff]
  %v19 = vld [vmem:[%s0 + $0x8] sm:$0xff]
  %v20 = vpack.c.bf16 %v19, %v18
  %v21 = vld [vmem:[%s1] sm:$0xff]
  %v22 = vld [vmem:[%s1 + $0x8] sm:$0xff]
  %v23 = vld [vmem:[%s1 + $0x10] sm:$0xff]
  %v24 = vld [vmem:[%s1 + $0x18] sm:$0xff]
  %v25 = vpack.c.bf16 %v22, %v21
  %v26 = vpack.c.bf16 %v24, %v23
  %vm27 = vcmask 261120
  %v29 = vsel %vm27, %v20, 0
  %v32 = vsel %vm27, %v25, 0
  %v35 = vsel %vm27, %v26, 0
  %37 = vmatpush.bf16.xpose.msra.mxu0 0
  %38 = vmatpush.bf16.xpose.msra.mxu0 0
  %39 = vmatpush.bf16.xpose.msra.mxu0 0
  %40 = vmatpush.bf16.xpose.msra.mxu0 0
  %41 = vmatpush.bf16.xpose.msra.mxu0 0
  %42 = vmatpush.bf16.xpose.msra.mxu0 0
  %43 = vmatpush.bf16.xpose.msra.mxu0 %v35
  %44 = vmatpush.bf16.xpose.msra.mxu0 %v32
  %45 = vmatmul.bf16.gmra.mxu0 %v29
  %v46 = vpop.f32.mrf.mxu0
  %v47 = vadd.f32 0.0, %v46
  %v48 = vpop.f32.mrf.mxu0
  %v49 = vadd.f32 0.0, %v48
  %50 = vdwg.mxu0
  %v51 = vld [vmem:[%s3] sm:$0xff]
  %v52 = vld [vmem:[%s3 + $0x8] sm:$0xff]
  %v53 = vadd.f32 %v51, %v47
  %v54 = vadd.f32 %v52, %v49
  %v55 = vld [vmem:[%s2] sm:$0x1]
  %v57 = vperm.slane %v55, 0
  %v59 = vadd.f32 %v53, %v57
  %v60 = vadd.f32 %v54, %v57
  %61 = vst.msk [vmem:[%s4] sm:$0xff] %vm27, %v59
  %62 = vst.msk [vmem:[%s4 + $0x8] sm:$0xff] %vm27, %v60
  // Predicated region
  $region18: #{gpt_for_causal_lm.12} parent=0 // pred_check
    _
  $region19: #{gpt_for_causal_lm.12} parent=0 // pred_check_branch
    %64 = sbr.rel (0) target = $region21
  $region20: #{gpt_for_causal_lm.12} parent=0 // pred_region
    _
  $region21: #{gpt_for_causal_lm.12} parent=0 // pred_fallthru
    _
  // Predicated region
  $region22: #{gpt_for_causal_lm.12} parent=0 // pred_check
    _
  $region23: #{gpt_for_causal_lm.12} parent=0 // pred_check_branch
    %66 = sbr.rel (0) target = $region25
  $region24: #{gpt_for_causal_lm.12} parent=0 // pred_region
    _
  $region25: #{gpt_for_causal_lm.12} parent=0 // pred_fallthru
    _

// kernel: gpt_for_causal_lm.11
$region0: #{gpt_for_causal_lm.11}
  #allocation0 [shape = 'u32[]', space=smem, size = 0x4, offset = 0x4, fixed_abs, tag = 'smem constant byte address 0x4 - core index']
  #allocation1 [shape = 'u32[72,128]{1,0:T(1,128)}', space=vmem, size = 0x9000, scoped, tag = 'internal scratch']
  %s0 = inlined_call_operand.vmem [shape: f32[2,8,96], index: 0, kind: input, shape index: {}]
  %s1 = inlined_call_operand.vmem [shape: f32[2,8,32], index: 1, kind: output, shape index: {}]
  %s2 = sld [smem:[#allocation0]]
  $region37: #{gpt_for_causal_lm.11} parent=0
    _
  %s4 = ssub.s32 1, %s2
  %s5 = scalar_select 0, %s4, %s2
  loop: start=0, step=1, limit=4
  $region2: #{gpt_for_causal_lm.11} parent=0 // loop_pre_header
    _
  $region3: #{gpt_for_causal_lm.11} parent=0 // loop_header
    %s7 = sphi 0, %s11
    %p8 = scmp.ge.s32.totalorder %s7, 4
    %s17 = sphi 0, %s19
    %s20 = sphi 0, %s17
    %s21 = sphi 0, %s20
    %s37 = sphi 0, %s21
    %s43 = sphi 0, %s45
    %s46 = sphi 0, %s43
    %s47 = sphi 0, %s46
    %s63 = sphi 0, %s47
  $region4: #{gpt_for_causal_lm.11} parent=0 // loop_header_branch
    %10 = sbr.rel (%p8) target = $region8
  $region5: #{gpt_for_causal_lm.11} parent=0 // loop_body
    %s12 = ssub.s32 %s7, 1
    %s13 = ssub.s32 %s7, 2
    %s14 = sadd.s32 %s7, 1
    %s15 = ssub.s32 %s7, %s14
    %p16 = scmp.eq.s32.totalorder %s15, 0
    %s18 = sadd.s32 %s17, 1
    %s19 = scalar_select %p16, %s17, %s18
    %p22 = pneg %p16
    %p23 = scmp.eq.s32.totalorder %s7, 1
    %p24 = por %p22, %p23
    %p25 = scmp.ne.s32.totalorder %s17, %s20
    %p26 = scmp.eq.s32.totalorder %s7, 0
    %p27 = por %p25, %p26
    %p28 = scmp.ne.s32.totalorder %s17, %s20
    %p29 = scmp.eq.s32.totalorder %s12, 1
    %p30 = por %p28, %p29
    %p31 = scmp.ne.s32.totalorder %s20, %s21
    %p32 = scmp.eq.s32.totalorder %s12, 0
    %p33 = por %p31, %p32
    %p34 = scmp.ne.s32.totalorder %s20, %s21
    %p35 = scmp.eq.s32.totalorder %s13, 1
    %p36 = por %p34, %p35
    %p38 = scmp.ne.s32.totalorder %s21, %s37
    %p39 = scmp.eq.s32.totalorder %s13, 0
    %p40 = por %p38, %p39
    %s41 = ssub.s32 %s7, %s14
    %p42 = scmp.eq.s32.totalorder %s41, 0
    %s44 = sadd.s32 %s43, 1
    %s45 = scalar_select %p42, %s43, %s44
    %p48 = pneg %p42
    %p49 = scmp.eq.s32.totalorder %s7, 1
    %p50 = por %p48, %p49
    %p51 = scmp.ne.s32.totalorder %s43, %s46
    %p52 = scmp.eq.s32.totalorder %s7, 0
    %p53 = por %p51, %p52
    %p54 = scmp.ne.s32.totalorder %s43, %s46
    %p55 = scmp.eq.s32.totalorder %s12, 1
    %p56 = por %p54, %p55
    %p57 = scmp.ne.s32.totalorder %s46, %s47
    %p58 = scmp.eq.s32.totalorder %s12, 0
    %p59 = por %p57, %p58
    %p60 = scmp.ne.s32.totalorder %s46, %s47
    %p61 = scmp.eq.s32.totalorder %s13, 1
    %p62 = por %p60, %p61
    %p64 = scmp.ne.s32.totalorder %s47, %s63
    %p65 = scmp.eq.s32.totalorder %s13, 0
    %p66 = por %p64, %p65
    %p67 = scmp.le.s32.totalorder 1, %s7
    %p68 = scmp.lt.s32.totalorder %s7, 3
    %p69 = pnand %p67, %p68
    %p70 = pneg %p69
    // Predicated region
    $region9: #{gpt_for_causal_lm.11} parent=5 // pred_check
      _
    $region10: #{gpt_for_causal_lm.11} parent=5 // pred_check_branch
      %72 = sbr.rel (%p69) target = $region12
    $region11: #{gpt_for_causal_lm.11} parent=5 // pred_region
      %s73 = ssub.s32 %s7, 1
    $region12: #{gpt_for_causal_lm.11} parent=5 // pred_fallthru
      _
    %p74 = scmp.lt.s32.totalorder %s7, 2
    // Predicated region
    $region13: #{gpt_for_causal_lm.11} parent=5 // pred_check
      %p75 = pneg %p74
    $region14: #{gpt_for_causal_lm.11} parent=5 // pred_check_branch
      %77 = sbr.rel (%p75) target = $region16
    $region15: #{gpt_for_causal_lm.11} parent=5 // pred_region
      // Predicated region
      $region17: #{gpt_for_causal_lm.11} parent=15 // pred_check
        %p78 = pneg %p27
      $region18: #{gpt_for_causal_lm.11} parent=15 // pred_check_branch
        %80 = sbr.rel (%p78) target = $region20
      $region19: #{gpt_for_causal_lm.11} parent=15 // pred_region
        %p81 = scmp.lt.s32.totalorder %s7, 1
        %s82 = scalar_select %p81, %s7, 1
        %s83 = smul.addr %s82, 8
        %s84 = scalar_lea.vmem %s0, %s83
      $region20: #{gpt_for_causal_lm.11} parent=15 // pred_fallthru
        _
    $region16: #{gpt_for_causal_lm.11} parent=5 // pred_fallthru
      _
    %p85 = scmp.le.s32.totalorder 1, %s7
    %p86 = scmp.lt.s32.totalorder %s7, 3
    %p87 = pnand %p85, %p86
    %p88 = pneg %p87
    // Predicated region
    $region21: #{gpt_for_causal_lm.11} parent=5 // pred_check
      _
    $region22: #{gpt_for_causal_lm.11} parent=5 // pred_check_branch
      %90 = sbr.rel (%p87) target = $region24
    $region23: #{gpt_for_causal_lm.11} parent=5 // pred_region
      %s91 = ssub.s32 %s7, 1
      %p92 = scmp.lt.s32.totalorder %s12, 1
      %s93 = scalar_select %p92, %s12, 1
      %s94 = smul.addr %s93, 8
      %s95 = scalar_lea.vmem %s0, %s94
      %p96 = pneg %p33
      %p97 = pneg %p30
      %p98 = pneg %p59
      %p99 = pneg %p56
      %p100 = scmp.lt.s32.totalorder %s12, 1
      %s101 = scalar_select %p100, %s12, 1
      %s102 = smul.addr %s101, 8
      %s103 = scalar_lea.vmem %s1, %s102
      %p104 = scmp.lt.s32.totalorder %s12, 1
      %s105 = scalar_select %p104, %s12, 1
      %s106 = smul.addr %s105, 8
      %s107 = scalar_lea.vmem %s0, %s106
      %p108 = scmp.lt.s32.totalorder %s12, 1
      %s109 = scalar_select %p108, %s12, 1
      %s110 = smul.addr %s109, 8
      %s111 = scalar_lea.vmem %s1, %s110
      %v113 = vlaneseq
      %v114 = vshrl.u32 %v113, 7
      %v115 = vlaneseq
      %v116 = vand.u32 %v115, 127
      %vm117 = vcmp.le.s32.totalorder %v116, %v114
      %v118 = vld [vmem:[%s107] sm:$0xff]
      %v119 = vpack.c.bf16 %v118, %v118
      %121 = vrot.lane.b32.xlu0 %v119, 96
      %v122 = vpop.permute.xlu0 %121
      %vm123 = vcmask 64512
      %v125 = vsel %vm123, %v119, 0
      %v128 = vsel %vm123, %v122, 0
      %130 = vmatpush.bf16.xpose.msra.mxu0 0
      %131 = vmatpush.bf16.xpose.msra.mxu0 0
      %132 = vmatpush.bf16.xpose.msra.mxu0 0
      %133 = vmatpush.bf16.xpose.msra.mxu0 0
      %134 = vmatpush.bf16.xpose.msra.mxu0 0
      %135 = vmatpush.bf16.xpose.msra.mxu0 0
      %136 = vmatpush.bf16.xpose.msra.mxu0 0
      %137 = vmatpush.bf16.xpose.msra.mxu0 %v128
      %138 = vmatmul.bf16.gmra.mxu0 %v125
      %v139 = vpop.f32.mrf.mxu0
      %v140 = vadd.f32 0.0, %v139
      %v141 = vpop.f32.mrf.mxu0
      %142 = vdwg.mxu0
      %v143 = vmul.f32 %v140, 0.35355338
      %v144 = vsel %vm117, %v143, -1e+30
      %v145 = vsel %vm123, %v144, -inf
      %146 = vmax.xlane.f32.xlu0 %v145
      %v147 = vpop.xlane.xlu0 %146
      %v148 = vsub.f32 %v144, %v147
      %v149 = vmul.f32 %v148, 1.442695
      %v150 = vpow.pop %v149
      %v151 = vsel %vm123, %v150, 0.0
      %152 = vadd.xlane.f32.xlu0 %v151
      %v153 = vpop.xlane.xlu0 %152
      %v154 = vrcp.pop %v153
      %v155 = vmul.f32 %v150, %v154
      %v156 = vpack.c.bf16 %v155, %v155
      %157 = vrot.lane.b32.xlu0 %v119, 64
      %v158 = vpop.permute.xlu0 %157
      %v160 = vsel %vm123, %v156, 0
      %vm162 = vcmask 1043456
      %v164 = vsel %vm162, %v158, 0
      %166 = vmatpush.bf16.msra.mxu0 0
      %167 = vmatpush.bf16.msra.mxu0 0
      %168 = vmatpush.bf16.msra.mxu0 0
      %169 = vmatpush.bf16.msra.mxu0 0
      %170 = vmatpush.bf16.msra.mxu0 0
      %171 = vmatpush.bf16.msra.mxu0 0
      %172 = vmatpush.bf16.msra.mxu0 0
      %173 = vmatpush.bf16.msra.mxu0 %v164
      %174 = vmatmul.bf16.gmra.mxu0 %v160
      %v175 = vpop.f32.mrf.mxu0
      %v176 = vadd.f32 0.0, %v175
      %v177 = vpop.f32.mrf.mxu0
      %178 = vdwg.mxu0
      %179 = vrot.lane.b32.xlu0 %v119, 120
      %v180 = vpop.permute.xlu0 %179
      %181 = vrot.lane.b32.xlu0 %v119, 88
      %v182 = vpop.permute.xlu0 %181
      %v184 = vsel %vm123, %v180, 0
      %v187 = vsel %vm123, %v182, 0
      %189 = vmatpush.bf16.xpose.msra.mxu0 0
      %190 = vmatpush.bf16.xpose.msra.mxu0 0
      %191 = vmatpush.bf16.xpose.msra.mxu0 0
      %192 = vmatpush.bf16.xpose.msra.mxu0 0
      %193 = vmatpush.bf16.xpose.msra.mxu0 0
      %194 = vmatpush.bf16.xpose.msra.mxu0 0
      %195 = vmatpush.bf16.xpose.msra.mxu0 0
      %196 = vmatpush.bf16.xpose.msra.mxu0 %v187
      %197 = vmatmul.bf16.gmra.mxu0 %v184
      %v198 = vpop.f32.mrf.mxu0
      %v199 = vadd.f32 0.0, %v198
      %v200 = vpop.f32.mrf.mxu0
      %201 = vdwg.mxu0
      %v202 = vmul.f32 %v199, 0.35355338
      %v203 = vsel %vm117, %v202, -1e+30
      %v204 = vsel %vm123, %v203, -inf
      %205 = vmax.xlane.f32.xlu0 %v204
      %v206 = vpop.xlane.xlu0 %205
      %v207 = vsub.f32 %v203, %v206
      %v208 = vmul.f32 %v207, 1.442695
      %v209 = vpow.pop %v208
      %v210 = vsel %vm123, %v209, 0.0
      %211 = vadd.xlane.f32.xlu0 %v210
      %v212 = vpop.xlane.xlu0 %211
      %v213 = vrcp.pop %v212
      %v214 = vmul.f32 %v209, %v213
      %v215 = vpack.c.bf16 %v214, %v214
      %216 = vrot.lane.b32.xlu0 %v119, 56
      %v217 = vpop.permute.xlu0 %216
      %v219 = vsel %vm123, %v215, 0
      %v222 = vsel %vm162, %v217, 0
      %224 = vmatpush.bf16.msra.mxu0 0
      %225 = vmatpush.bf16.msra.mxu0 0
      %226 = vmatpush.bf16.msra.mxu0 0
      %227 = vmatpush.bf16.msra.mxu0 0
      %228 = vmatpush.bf16.msra.mxu0 0
      %229 = vmatpush.bf16.msra.mxu0 0
      %230 = vmatpush.bf16.msra.mxu0 0
      %231 = vmatpush.bf16.msra.mxu0 %v222
      %232 = vmatmul.bf16.gmra.mxu0 %v219
      %v233 = vpop.f32.mrf.mxu0
      %v234 = vadd.f32 0.0, %v233
      %v235 = vpop.f32.mrf.mxu0
      %236 = vdwg.mxu0
      %237 = vrot.lane.b32.xlu0 %v119, 112
      %v238 = vpop.permute.xlu0 %237
      %239 = vrot.lane.b32.xlu0 %v119, 80
      %v240 = vpop.permute.xlu0 %239
      %v242 = vsel %vm123, %v238, 0
      %v245 = vsel %vm123, %v240, 0
      %247 = vmatpush.bf16.xpose.msra.mxu0 0
      %248 = vmatpush.bf16.xpose.msra.mxu0 0
      %249 = vmatpush.bf16.xpose.msra.mxu0 0
      %250 = vmatpush.bf16.xpose.msra.mxu0 0
      %251 = vmatpush.bf16.xpose.msra.mxu0 0
      %252 = vmatpush.bf16.xpose.msra.mxu0 0
      %253 = vmatpush.bf16.xpose.msra.mxu0 0
      %254 = vmatpush.bf16.xpose.msra.mxu0 %v245
      %255 = vmatmul.bf16.gmra.mxu0 %v242
      %v256 = vpop.f32.mrf.mxu0
      %v257 = vadd.f32 0.0, %v256
      %v258 = vpop.f32.mrf.mxu0
      %259 = vdwg.mxu0
      %v260 = vmul.f32 %v257, 0.35355338
      %v261 = vsel %vm117, %v260, -1e+30
      %v262 = vsel %vm123, %v261, -inf
      %263 = vmax.xlane.f32.xlu0 %v262
      %v264 = vpop.xlane.xlu0 %263
      %v265 = vsub.f32 %v261, %v264
      %v266 = vmul.f32 %v265, 1.442695
      %v267 = vpow.pop %v266
      %v268 = vsel %vm123, %v267, 0.0
      %269 = vadd.xlane.f32.xlu0 %v268
      %v270 = vpop.xlane.xlu0 %269
      %v271 = vrcp.pop %v270
      %v272 = vmul.f32 %v267, %v271
      %v273 = vpack.c.bf16 %v272, %v272
      %274 = vrot.lane.b32.xlu0 %v119, 48
      %v275 = vpop.permute.xlu0 %274
      %v277 = vsel %vm123, %v273, 0
      %v280 = vsel %vm162, %v275, 0
      %282 = vmatpush.bf16.msra.mxu0 0
      %283 = vmatpush.bf16.msra.mxu0 0
      %284 = vmatpush.bf16.msra.mxu0 0
      %285 = vmatpush.bf16.msra.mxu0 0
      %286 = vmatpush.bf16.msra.mxu0 0
      %287 = vmatpush.bf16.msra.mxu0 0
      %288 = vmatpush.bf16.msra.mxu0 0
      %289 = vmatpush.bf16.msra.mxu0 %v280
      %290 = vmatmul.bf16.gmra.mxu0 %v277
      %v291 = vpop.f32.mrf.mxu0
      %v292 = vadd.f32 0.0, %v291
      %v293 = vpop.f32.mrf.mxu0
      %294 = vdwg.mxu0
      %295 = vrot.lane.b32.xlu0 %v119, 104
      %v296 = vpop.permute.xlu0 %295
      %297 = vrot.lane.b32.xlu0 %v119, 72
      %v298 = vpop.permute.xlu0 %297
      %v300 = vsel %vm123, %v296, 0
      %v303 = vsel %vm123, %v298, 0
      %305 = vmatpush.bf16.xpose.msra.mxu0 0
      %306 = vmatpush.bf16.xpose.msra.mxu0 0
      %307 = vmatpush.bf16.xpose.msra.mxu0 0
      %308 = vmatpush.bf16.xpose.msra.mxu0 0
      %309 = vmatpush.bf16.xpose.msra.mxu0 0
      %310 = vmatpush.bf16.xpose.msra.mxu0 0
      %311 = vmatpush.bf16.xpose.msra.mxu0 0
      %312 = vmatpush.bf16.xpose.msra.mxu0 %v303
      %313 = vmatmul.bf16.gmra.mxu0 %v300
      %v314 = vpop.f32.mrf.mxu0
      %v315 = vadd.f32 0.0, %v314
      %v316 = vpop.f32.mrf.mxu0
      %317 = vdwg.mxu0
      %v318 = vmul.f32 %v315, 0.35355338
      %v319 = vsel %vm117, %v318, -1e+30
      %v320 = vsel %vm123, %v319, -inf
      %321 = vmax.xlane.f32.xlu0 %v320
      %v322 = vpop.xlane.xlu0 %321
      %v323 = vsub.f32 %v319, %v322
      %v324 = vmul.f32 %v323, 1.442695
      %v325 = vpow.pop %v324
      %v326 = vsel %vm123, %v325, 0.0
      %327 = vadd.xlane.f32.xlu0 %v326
      %v328 = vpop.xlane.xlu0 %327
      %v329 = vrcp.pop %v328
      %v330 = vmul.f32 %v325, %v329
      %v331 = vpack.c.bf16 %v330, %v330
      %332 = vrot.lane.b32.xlu0 %v119, 40
      %v333 = vpop.permute.xlu0 %332
      %v335 = vsel %vm123, %v331, 0
      %v338 = vsel %vm162, %v333, 0
      %340 = vmatpush.bf16.msra.mxu0 0
      %341 = vmatpush.bf16.msra.mxu0 0
      %342 = vmatpush.bf16.msra.mxu0 0
      %343 = vmatpush.bf16.msra.mxu0 0
      %344 = vmatpush.bf16.msra.mxu0 0
      %345 = vmatpush.bf16.msra.mxu0 0
      %346 = vmatpush.bf16.msra.mxu0 0
      %347 = vmatpush.bf16.msra.mxu0 %v338
      %348 = vmatmul.bf16.gmra.mxu0 %v335
      %v349 = vpop.f32.mrf.mxu0
      %v350 = vadd.f32 0.0, %v349
      %v351 = vpop.f32.mrf.mxu0
      %352 = vdwg.mxu0
      %354 = vrot.lane.b32.xlu0 %v234, 8
      %v355 = vpop.permute.xlu0 %354
      %358 = vrot.lane.b32.xlu0 %v292, 16
      %v359 = vpop.permute.xlu0 %358
      %362 = vrot.lane.b32.xlu0 %v350, 24
      %v363 = vpop.permute.xlu0 %362
      %v365 = vsel %vm123, %v176, %v355
      %vm366 = vcmask 130048
      %v367 = vsel %vm366, %v365, %v359
      %vm368 = vcmask 195584
      %v369 = vsel %vm368, %v367, %v363
      %vm370 = vcmask 261120
      %371 = vst.msk [vmem:[%s111] sm:$0xff] %vm370, %v369
      %p372 = scmp.lt.s32.totalorder %s12, 1
      %s373 = scalar_select %p372, %s12, 1
      %s374 = smul.addr %s373, 8
      %s375 = scalar_lea.vmem %s1, %s374
      // Predicated region
      $region25: #{gpt_for_causal_lm.11} parent=23 // pred_check
        %p376 = pneg %p56
      $region26: #{gpt_for_causal_lm.11} parent=23 // pred_check_branch
        %378 = sbr.rel (%p376) target = $region28
      $region27: #{gpt_for_causal_lm.11} parent=23 // pred_region
        _
      $region28: #{gpt_for_causal_lm.11} parent=23 // pred_fallthru
        _
    $region24: #{gpt_for_causal_lm.11} parent=5 // pred_fallthru
      _
    %p379 = scmp.le.s32.totalorder 2, %s7
    // Predicated region
    $region29: #{gpt_for_causal_lm.11} parent=5 // pred_check
      %p380 = pneg %p379
    $region30: #{gpt_for_causal_lm.11} parent=5 // pred_check_branch
      %382 = sbr.rel (%p380) target = $region32
    $region31: #{gpt_for_causal_lm.11} parent=5 // pred_region
      %s383 = ssub.s32 %s7, 2
      // Predicated region
      $region33: #{gpt_for_causal_lm.11} parent=31 // pred_check
        %p384 = pneg %p62
      $region34: #{gpt_for_causal_lm.11} parent=31 // pred_check_branch
        %386 = sbr.rel (%p384) target = $region36
      $region35: #{gpt_for_causal_lm.11} parent=31 // pred_region
        %p387 = scmp.lt.s32.totalorder %s13, 1
        %s388 = scalar_select %p387, %s13, 1
        %s389 = smul.addr %s388, 8
        %s390 = scalar_lea.vmem %s1, %s389
      $region36: #{gpt_for_causal_lm.11} parent=31 // pred_fallthru
        _
    $region32: #{gpt_for_causal_lm.11} parent=5 // pred_fallthru
      _
  $region6: #{gpt_for_causal_lm.11} parent=0 // loop_footer
    %s11 = sadd.s32 1, %s7
  $region7: #{gpt_for_causal_lm.11} parent=0 // loop_footer_branch
    %6 = sbr.rel target = $region3
  $region8: #{gpt_for_causal_lm.11} parent=0 // loop_exit
    _

// kernel: gpt_for_causal_lm.13
$region0: #{gpt_for_causal_lm.13}
  #allocation0 [shape = 'u32[]', space=smem, size = 0x4, offset = 0x4, fixed_abs, tag = 'smem constant byte address 0x4 - core index']
  #allocation1 [shape = 'u32[72,128]{1,0:T(1,128)}', space=vmem, size = 0x9000, scoped, tag = 'internal scratch']
  #allocation2 [shape = 'f32[16,32]{1,0:T(8,128)}', space=vmem, size = 0x2000, scoped, tag = 'scratch operand']
  #allocation3 [shape = 'bf16[16,32]{1,0:T(8,128)(2,1)}', space=vmem, size = 0x1000, scoped, tag = 'scratch operand']
  %s0 = inlined_call_operand.vmem [shape: f32[16,32], index: 0, kind: input, shape index: {}]
  %s1 = inlined_call_operand.vmem [shape: f32[1,32], index: 1, kind: input, shape index: {}]
  %s2 = inlined_call_operand.vmem [shape: f32[1,32], index: 2, kind: input, shape index: {}]
  %s3 = inlined_call_operand.vmem [shape: f32[64,32], index: 3, kind: input, shape index: {}]
  %s4 = inlined_call_operand.vmem [shape: f32[1,64], index: 4, kind: input, shape index: {}]
  %s5 = inlined_call_operand.vmem [shape: f32[32,64], index: 5, kind: input, shape index: {}]
  %s6 = inlined_call_operand.vmem [shape: f32[1,32], index: 6, kind: input, shape index: {}]
  %s7 = inlined_call_operand.vmem [shape: f32[16,32], index: 7, kind: output, shape index: {}]
  %s8 = sld [smem:[#allocation0]]
  $region46: #{gpt_for_causal_lm.13} parent=0
    _
  %s10 = ssub.s32 1, %s8
  %s11 = scalar_select 0, %s10, %s8
  // Predicated region
  $region2: #{gpt_for_causal_lm.13} parent=0 // pred_check
    _
  $region3: #{gpt_for_causal_lm.13} parent=0 // pred_check_branch
    %13 = sbr.rel (0) target = $region5
  $region4: #{gpt_for_causal_lm.13} parent=0 // pred_region
    _
  $region5: #{gpt_for_causal_lm.13} parent=0 // pred_fallthru
    _
  // Predicated region
  $region6: #{gpt_for_causal_lm.13} parent=0 // pred_check
    _
  $region7: #{gpt_for_causal_lm.13} parent=0 // pred_check_branch
    %15 = sbr.rel (0) target = $region9
  $region8: #{gpt_for_causal_lm.13} parent=0 // pred_region
    _
  $region9: #{gpt_for_causal_lm.13} parent=0 // pred_fallthru
    _
  // Predicated region
  $region10: #{gpt_for_causal_lm.13} parent=0 // pred_check
    _
  $region11: #{gpt_for_causal_lm.13} parent=0 // pred_check_branch
    %17 = sbr.rel (0) target = $region13
  $region12: #{gpt_for_causal_lm.13} parent=0 // pred_region
    _
  $region13: #{gpt_for_causal_lm.13} parent=0 // pred_fallthru
    _
  // Predicated region
  $region14: #{gpt_for_causal_lm.13} parent=0 // pred_check
    _
  $region15: #{gpt_for_causal_lm.13} parent=0 // pred_check_branch
    %19 = sbr.rel (0) target = $region17
  $region16: #{gpt_for_causal_lm.13} parent=0 // pred_region
    _
  $region17: #{gpt_for_causal_lm.13} parent=0 // pred_fallthru
    _
  // Predicated region
  $region18: #{gpt_for_causal_lm.13} parent=0 // pred_check
    _
  $region19: #{gpt_for_causal_lm.13} parent=0 // pred_check_branch
    %21 = sbr.rel (0) target = $region21
  $region20: #{gpt_for_causal_lm.13} parent=0 // pred_region
    _
  $region21: #{gpt_for_causal_lm.13} parent=0 // pred_fallthru
    _
  // Predicated region
  $region22: #{gpt_for_causal_lm.13} parent=0 // pred_check
    _
  $region23: #{gpt_for_causal_lm.13} parent=0 // pred_check_branch
    %23 = sbr.rel (0) target = $region25
  $region24: #{gpt_for_causal_lm.13} parent=0 // pred_region
    _
  $region25: #{gpt_for_causal_lm.13} parent=0 // pred_fallthru
    _
  // Predicated region
  $region26: #{gpt_for_causal_lm.13} parent=0 // pred_check
    _
  $region27: #{gpt_for_causal_lm.13} parent=0 // pred_check_branch
    %25 = sbr.rel (0) target = $region29
  $region28: #{gpt_for_causal_lm.13} parent=0 // pred_region
    _
  $region29: #{gpt_for_causal_lm.13} parent=0 // pred_fallthru
    _
  %p27 = scmp.eq.s32.totalorder 0, 0
  // Predicated region
  $region30: #{gpt_for_causal_lm.13} parent=0 // pred_check
    %p28 = pneg %p27
  $region31: #{gpt_for_causal_lm.13} parent=0 // pred_check_branch
    %30 = sbr.rel (%p28) target = $region33
  $region32: #{gpt_for_causal_lm.13} parent=0 // pred_region
    %v31 = vld [vmem:[%s0] sm:$0xff]
    %v32 = vld [vmem:[%s0 + $0x8] sm:$0xff]
    %v33 = vld [vmem:[%s1] sm:$0x1]
    %v34 = vld [vmem:[%s2] sm:$0x1]
    %vm35 = vcmask 261120
    %v36 = vsel %vm35, %v31, 0.0
    %37 = vadd.xlane.f32.xlu0 %v36
    %v38 = vpop.xlane.xlu0 %37
    %v39 = vsel %vm35, %v32, 0.0
    %40 = vadd.xlane.f32.xlu0 %v39
    %v41 = vpop.xlane.xlu0 %40
    %v42 = vrcp.pop 32.0
    %v43 = vmul.f32 32.0, %v42
    %v44 = vsub.f32 1.0, %v43
    %v45 = vmul.f32 %v42, %v44
    %v46 = vadd.f32 %v42, %v45
    %vm47 = vweird.f32 %v42
    %v48 = vsel %vm47, %v42, %v46
    %v49 = vmul.f32 %v38, %v48
    %v50 = vmul.f32 %v41, %v48
    %v51 = vsub.f32 %v31, %v49
    %v52 = vsub.f32 %v32, %v50
    %v53 = vmul.f32 %v51, %v51
    %v54 = vmul.f32 %v52, %v52
    %v55 = vsel %vm35, %v53, 0.0
    %56 = vadd.xlane.f32.xlu0 %v55
    %v57 = vpop.xlane.xlu0 %56
    %v58 = vsel %vm35, %v54, 0.0
    %59 = vadd.xlane.f32.xlu0 %v58
    %v60 = vpop.xlane.xlu0 %59
    %v61 = vmul.f32 %v57, %v48
    %v62 = vmul.f32 %v60, %v48
    %v63 = vadd.f32 %v61, 1e-05
    %v64 = vadd.f32 %v62, 1e-05
    %v65 = vrsqrt.pop %v63
    %v66 = vmul.f32 %v65, %v63
    %v67 = vmul.f32 %v66, %v65
    %v68 = vmul.f32 0.5, %v67
    %v69 = vsub.f32 1.5, %v68
    %v70 = vmul.f32 %v65, %v69
    %vm71 = vweird.f32 %v63
    %vm72 = vweird.f32 %v65
    %vm73 = vmor %vm71, %vm72
    %v74 = vsel %vm73, %v65, %v70
    %v75 = vrsqrt.pop %v64
    %v76 = vmul.f32 %v75, %v64
    %v77 = vmul.f32 %v76, %v75
    %v78 = vmul.f32 0.5, %v77
    %v79 = vsub.f32 1.5, %v78
    %v80 = vmul.f32 %v75, %v79
    %vm81 = vweird.f32 %v64
    %vm82 = vweird.f32 %v75
    %vm83 = vmor %vm81, %vm82
    %v84 = vsel %vm83, %v75, %v80
    %v85 = vmul.f32 %v51, %v74
    %v86 = vmul.f32 %v52, %v84
    %v88 = vperm.slane %v33, 0
    %v90 = vmul.f32 %v85, %v88
    %v91 = vmul.f32 %v86, %v88
    %v93 = vperm.slane %v34, 0
    %v95 = vadd.f32 %v90, %v93
    %v96 = vadd.f32 %v91, %v93
    %v97 = vpack.c.bf16 %v95, %v95
    %v98 = vpack.c.bf16 %v96, %v96
    %vm99 = vcmask 257024
    %100 = vst.msk [vmem:[#allocation3] sm:$0xf] %vm99, %v97
    %101 = vst.msk [vmem:[#allocation3 + $0x4] sm:$0xf] %vm99, %v98
    %102 = vst.msk [vmem:[#allocation2] sm:$0xff] %vm35, 0.0
    %103 = vst.msk [vmem:[#allocation2 + $0x8] sm:$0xff] %vm35, 0.0
  $region33: #{gpt_for_causal_lm.13} parent=0 // pred_fallthru
    _
  %v104 = vld [vmem:[#allocation3] sm:$0xf]
  %v105 = vld [vmem:[#allocation3 + $0x4] sm:$0xf]
  %v106 = vld [vmem:[%s3] sm:$0xff]
  %v107 = vld [vmem:[%s3 + $0x8] sm:$0xff]
  %v108 = vld [vmem:[%s3 + $0x10] sm:$0xff]
  %v109 = vld [vmem:[%s3 + $0x18] sm:$0xff]
  %v110 = vld [vmem:[%s3 + $0x20] sm:$0xff]
  %v111 = vld [vmem:[%s3 + $0x28] sm:$0xff]
  %v112 = vld [vmem:[%s3 + $0x30] sm:$0xff]
  %v113 = vld [vmem:[%s3 + $0x38] sm:$0xff]
  %v114 = vpack.c.bf16 %v107, %v106
  %v115 = vpack.c.bf16 %v109, %v108
  %v116 = vpack.c.bf16 %v111, %v110
  %v117 = vpack.c.bf16 %v113, %v112
  %v118 = vld [vmem:[%s4] sm:$0x1]
  %v120 = vperm.slane %v118, 0
  %v124 = vunpack.c.l.b16 %v104
  %v125 = vunpack.c.l.b16 %v105
  %v126 = vpack.c.b16 %v125, %v124
  %vm127 = vcmask 261120
  %v129 = vsel %vm127, %v126, 0
  %v132 = vsel %vm127, %v114, 0
  %v135 = vsel %vm127, %v115, 0
  %v138 = vsel %vm127, %v116, 0
  %v141 = vsel %vm127, %v117, 0
  %143 = vmatpush.bf16.xpose.msra.mxu0 0
  %144 = vmatpush.bf16.xpose.msra.mxu0 0
  %145 = vmatpush.bf16.xpose.msra.mxu0 0
  %146 = vmatpush.bf16.xpose.msra.mxu0 0
  %147 = vmatpush.bf16.xpose.msra.mxu0 %v141
  %148 = vmatpush.bf16.xpose.msra.mxu0 %v138
  %149 = vmatpush.bf16.xpose.msra.mxu0 %v135
  %150 = vmatpush.bf16.xpose.msra.mxu0 %v132
  %151 = vmatmul.bf16.gmra.mxu0 %v129
  %v152 = vpop.f32.mrf.mxu0
  %v153 = vadd.f32 %v120, %v152
  %v154 = vpop.f32.mrf.mxu0
  %v155 = vadd.f32 %v120, %v154
  %156 = vdwg.mxu0
  %v157 = vmul.f32 %v153, 0.5
  %v158 = vmul.f32 %v155, 0.5
  %v159 = vmul.f32 %v153, 0.70710677
  %v160 = vmul.f32 %v155, 0.70710677
  %vm161 = vcmp.ge.f32.partialorder %v159, 0.0
  %vm162 = vcmp.ge.f32.partialorder %v160, 0.0
  %v163 = vsel %vm161, 1.0, -1.0
  %v164 = vsel %vm162, 1.0, -1.0
  %v165 = vand.u32 2147483647, %v159
  %v166 = vand.u32 2147483647, %v160
  %v167 = vmul.f32 %v165, 0.3275911
  %v168 = vmul.f32 %v166, 0.3275911
  %v169 = vadd.f32 %v167, 1.0
  %v170 = vadd.f32 %v168, 1.0
  %v171 = vrcp.pop %v169
  %v172 = vmul.f32 %v169, %v171
  %v173 = vsub.f32 1.0, %v172
  %v174 = vmul.f32 %v171, %v173
  %v175 = vadd.f32 %v171, %v174
  %vm176 = vweird.f32 %v169
  %vm177 = vweird.f32 %v171
  %vm178 = vmor %vm176, %vm177
  %v179 = vsel %vm178, %v171, %v175
  %v180 = vand.u32 2147483647, %v169
  %vm181 = vcmp.eq.f32.partialorder %v180, 8.507059e+37
  %v182 = vand.u32 %v169, 2147483648
  %v183 = vor.u32 1.1754944e-38, %v182
  %v184 = vsel %vm181, %v183, %v179
  %v185 = vmul.f32 1.0, %v184
  %v186 = vrcp.pop %v170
  %v187 = vmul.f32 %v170, %v186
  %v188 = vsub.f32 1.0, %v187
  %v189 = vmul.f32 %v186, %v188
  %v190 = vadd.f32 %v186, %v189
  %vm191 = vweird.f32 %v170
  %vm192 = vweird.f32 %v186
  %vm193 = vmor %vm191, %vm192
  %v194 = vsel %vm193, %v186, %v190
  %v195 = vand.u32 2147483647, %v170
  %vm196 = vcmp.eq.f32.partialorder %v195, 8.507059e+37
  %v197 = vand.u32 %v170, 2147483648
  %v198 = vor.u32 1.1754944e-38, %v197
  %v199 = vsel %vm196, %v198, %v194
  %v200 = vmul.f32 1.0, %v199
  %v201 = vmul.f32 %v185, 1.0614054
  %v202 = vmul.f32 %v200, 1.0614054
  %v203 = vadd.f32 %v201, -1.4531521
  %v204 = vadd.f32 %v202, -1.4531521
  %v205 = vmul.f32 %v203, %v185
  %v206 = vmul.f32 %v204, %v200
  %v207 = vadd.f32 %v205, 1.4214138
  %v208 = vadd.f32 %v206, 1.4214138
  %v209 = vmul.f32 %v207, %v185
  %v210 = vmul.f32 %v208, %v200
  %v211 = vadd.f32 %v209, -0.28449672
  %v212 = vadd.f32 %v210, -0.28449672
  %v213 = vmul.f32 %v211, %v185
  %v214 = vmul.f32 %v212, %v200
  %v215 = vadd.f32 %v213, 0.2548296
  %v216 = vadd.f32 %v214, 0.2548296
  %v217 = vmul.f32 %v215, %v185
  %v218 = vmul.f32 %v216, %v200
  %v219 = vsub.f32 0.0, %v165
  %v220 = vsub.f32 0.0, %v166
  %v221 = vmul.f32 %v219, %v165
  %v222 = vmul.f32 %v220, %v166
  %v223 = vmul.f32 %v221, 1.442695
  %v224 = vpow.pop %v223
  %v225 = vmul.f32 %v222, 1.442695
  %v226 = vpow.pop %v225
  %v227 = vmul.f32 %v217, %v224
  %v228 = vmul.f32 %v218, %v226
  %v229 = vsub.f32 1.0, %v227
  %v230 = vsub.f32 1.0, %v228
  %v231 = vmul.f32 %v163, %v229
  %v232 = vmul.f32 %v164, %v230
  %v233 = vadd.f32 %v231, 1.0
  %v234 = vadd.f32 %v232, 1.0
  %v235 = vmul.f32 %v157, %v233
  %v236 = vmul.f32 %v158, %v234
  %v237 = vld [vmem:[#allocation2] sm:$0xff]
  %v238 = vld [vmem:[#allocation2 + $0x8] sm:$0xff]
  %v239 = vpack.c.bf16 %v236, %v235
  %v240 = vld [vmem:[%s5] sm:$0xff]
  %v241 = vld [vmem:[%s5 + $0x8] sm:$0xff]
  %v242 = vld [vmem:[%s5 + $0x10] sm:$0xff]
  %v243 = vld [vmem:[%s5 + $0x18] sm:$0xff]
  %v244 = vpack.c.bf16 %v241, %v240
  %v245 = vpack.c.bf16 %v243, %v242
  %vm246 = vcmask 523264
  %v248 = vsel %vm246, %v239, 0
  %v251 = vsel %vm246, %v244, 0
  %v254 = vsel %vm246, %v245, 0
  %256 = vmatpush.bf16.xpose.msra.mxu0 0
  %257 = vmatpush.bf16.xpose.msra.mxu0 0
  %258 = vmatpush.bf16.xpose.msra.mxu0 0
  %259 = vmatpush.bf16.xpose.msra.mxu0 0
  %260 = vmatpush.bf16.xpose.msra.mxu0 0
  %261 = vmatpush.bf16.xpose.msra.mxu0 0
  %262 = vmatpush.bf16.xpose.msra.mxu0 %v254
  %263 = vmatpush.bf16.xpose.msra.mxu0 %v251
  %264 = vmatmul.bf16.gmra.mxu0 %v248
  %v265 = vpop.f32.mrf.mxu0
  %v266 = vadd.f32 0.0, %v265
  %v267 = vpop.f32.mrf.mxu0
  %v268 = vadd.f32 0.0, %v267
  %269 = vdwg.mxu0
  %v270 = vadd.f32 %v237, %v266
  %v271 = vadd.f32 %v238, %v268
  %272 = vst.msk [vmem:[#allocation2] sm:$0xff] %vm127, %v270
  %273 = vst.msk [vmem:[#allocation2 + $0x8] sm:$0xff] %vm127, %v271
  // Predicated region
  $region34: #{gpt_for_causal_lm.13} parent=0 // pred_check
    %p274 = pneg %p27
  $region35: #{gpt_for_causal_lm.13} parent=0 // pred_check_branch
    %276 = sbr.rel (%p274) target = $region37
  $region36: #{gpt_for_causal_lm.13} parent=0 // pred_region
    %v277 = vld [vmem:[%s0] sm:$0xff]
    %v278 = vld [vmem:[%s0 + $0x8] sm:$0xff]
    %v279 = vld [vmem:[#allocation2] sm:$0xff]
    %v280 = vld [vmem:[#allocation2 + $0x8] sm:$0xff]
    %v281 = vadd.f32 %v277, %v279
    %v282 = vadd.f32 %v278, %v280
    %v283 = vld [vmem:[%s6] sm:$0x1]
    %v285 = vperm.slane %v283, 0
    %v287 = vadd.f32 %v281, %v285
    %v288 = vadd.f32 %v282, %v285
    %289 = vst.msk [vmem:[%s7] sm:$0xff] %vm127, %v287
    %290 = vst.msk [vmem:[%s7 + $0x8] sm:$0xff] %vm127, %v288
  $region37: #{gpt_for_causal_lm.13} parent=0 // pred_fallthru
    _
  // Predicated region
  $region38: #{gpt_for_causal_lm.13} parent=0 // pred_check
    _
  $region39: #{gpt_for_causal_lm.13} parent=0 // pred_check_branch
    %292 = sbr.rel (0) target = $region41
  $region40: #{gpt_for_causal_lm.13} parent=0 // pred_region
    _
  $region41: #{gpt_for_causal_lm.13} parent=0 // pred_fallthru
    _
  // Predicated region
  $region42: #{gpt_for_causal_lm.13} parent=0 // pred_check
    _
  $region43: #{gpt_for_causal_lm.13} parent=0 // pred_check_branch
    %294 = sbr.rel (0) target = $region45
  $region44: #{gpt_for_causal_lm.13} parent=0 // pred_region
    _
  $region45: #{gpt_for_causal_lm.13} parent=0 // pred_fallthru
    _

// kernel: gpt_for_causal_lm.18
$region0: #{gpt_for_causal_lm.18}
  #allocation0 [shape = 'u32[]', space=smem, size = 0x4, offset = 0x4, fixed_abs, tag = 'smem constant byte address 0x4 - core index']
  #allocation1 [shape = 'u32[72,128]{1,0:T(1,128)}', space=vmem, size = 0x9000, scoped, tag = 'internal scratch']
  #allocation2 [shape = 'bf16[16,32]{1,0:T(8,128)(2,1)}', space=vmem, size = 0x1000, scoped, tag = 'scratch operand']
  %s0 = inlined_call_operand.vmem [shape: f32[16,32], index: 0, kind: input, shape index: {}]
  %s1 = inlined_call_operand.vmem [shape: f32[1,32], index: 1, kind: input, shape index: {}]
  %s2 = inlined_call_operand.vmem [shape: f32[1,32], index: 2, kind: input, shape index: {}]
  %s3 = inlined_call_operand.vmem [shape: f32[64,32], index: 3, kind: input, shape index: {}]
  %s4 = inlined_call_operand.vmem [shape: f32[1,64], index: 4, kind: input, shape index: {}]
  %s5 = inlined_call_operand.vmem [shape: f32[16,64], index: 5, kind: output, shape index: {}]
  %s6 = sld [smem:[#allocation0]]
  $region34: #{gpt_for_causal_lm.18} parent=0
    _
  %s8 = ssub.s32 1, %s6
  %s9 = scalar_select 0, %s8, %s6
  // Predicated region
  $region2: #{gpt_for_causal_lm.18} parent=0 // pred_check
    _
  $region3: #{gpt_for_causal_lm.18} parent=0 // pred_check_branch
    %11 = sbr.rel (0) target = $region5
  $region4: #{gpt_for_causal_lm.18} parent=0 // pred_region
    _
  $region5: #{gpt_for_causal_lm.18} parent=0 // pred_fallthru
    _
  // Predicated region
  $region6: #{gpt_for_causal_lm.18} parent=0 // pred_check
    _
  $region7: #{gpt_for_causal_lm.18} parent=0 // pred_check_branch
    %13 = sbr.rel (0) target = $region9
  $region8: #{gpt_for_causal_lm.18} parent=0 // pred_region
    _
  $region9: #{gpt_for_causal_lm.18} parent=0 // pred_fallthru
    _
  // Predicated region
  $region10: #{gpt_for_causal_lm.18} parent=0 // pred_check
    _
  $region11: #{gpt_for_causal_lm.18} parent=0 // pred_check_branch
    %15 = sbr.rel (0) target = $region13
  $region12: #{gpt_for_causal_lm.18} parent=0 // pred_region
    _
  $region13: #{gpt_for_causal_lm.18} parent=0 // pred_fallthru
    _
  // Predicated region
  $region14: #{gpt_for_causal_lm.18} parent=0 // pred_check
    _
  $region15: #{gpt_for_causal_lm.18} parent=0 // pred_check_branch
    %17 = sbr.rel (0) target = $region17
  $region16: #{gpt_for_causal_lm.18} parent=0 // pred_region
    _
  $region17: #{gpt_for_causal_lm.18} parent=0 // pred_fallthru
    _
  // Predicated region
  $region18: #{gpt_for_causal_lm.18} parent=0 // pred_check
    _
  $region19: #{gpt_for_causal_lm.18} parent=0 // pred_check_branch
    %19 = sbr.rel (0) target = $region21
  $region20: #{gpt_for_causal_lm.18} parent=0 // pred_region
    _
  $region21: #{gpt_for_causal_lm.18} parent=0 // pred_fallthru
    _
  %p21 = scmp.eq.s32.totalorder 0, 0
  // Predicated region
  $region22: #{gpt_for_causal_lm.18} parent=0 // pred_check
    %p22 = pneg %p21
  $region23: #{gpt_for_causal_lm.18} parent=0 // pred_check_branch
    %24 = sbr.rel (%p22) target = $region25
  $region24: #{gpt_for_causal_lm.18} parent=0 // pred_region
    %v25 = vld [vmem:[%s0] sm:$0xff]
    %v26 = vld [vmem:[%s0 + $0x8] sm:$0xff]
    %v27 = vld [vmem:[%s1] sm:$0x1]
    %v28 = vld [vmem:[%s2] sm:$0x1]
    %vm29 = vcmask 261120
    %v30 = vsel %vm29, %v25, 0.0
    %31 = vadd.xlane.f32.xlu0 %v30
    %v32 = vpop.xlane.xlu0 %31
    %v33 = vsel %vm29, %v26, 0.0
    %34 = vadd.xlane.f32.xlu0 %v33
    %v35 = vpop.xlane.xlu0 %34
    %v36 = vrcp.pop 32.0
    %v37 = vmul.f32 32.0, %v36
    %v38 = vsub.f32 1.0, %v37
    %v39 = vmul.f32 %v36, %v38
    %v40 = vadd.f32 %v36, %v39
    %vm41 = vweird.f32 %v36
    %v42 = vsel %vm41, %v36, %v40
    %v43 = vmul.f32 %v32, %v42
    %v44 = vmul.f32 %v35, %v42
    %v45 = vsub.f32 %v25, %v43
    %v46 = vsub.f32 %v26, %v44
    %v47 = vmul.f32 %v45, %v45
    %v48 = vmul.f32 %v46, %v46
    %v49 = vsel %vm29, %v47, 0.0
    %50 = vadd.xlane.f32.xlu0 %v49
    %v51 = vpop.xlane.xlu0 %50
    %v52 = vsel %vm29, %v48, 0.0
    %53 = vadd.xlane.f32.xlu0 %v52
    %v54 = vpop.xlane.xlu0 %53
    %v55 = vmul.f32 %v51, %v42
    %v56 = vmul.f32 %v54, %v42
    %v57 = vadd.f32 %v55, 1e-05
    %v58 = vadd.f32 %v56, 1e-05
    %v59 = vrsqrt.pop %v57
    %v60 = vmul.f32 %v59, %v57
    %v61 = vmul.f32 %v60, %v59
    %v62 = vmul.f32 0.5, %v61
    %v63 = vsub.f32 1.5, %v62
    %v64 = vmul.f32 %v59, %v63
    %vm65 = vweird.f32 %v57
    %vm66 = vweird.f32 %v59
    %vm67 = vmor %vm65, %vm66
    %v68 = vsel %vm67, %v59, %v64
    %v69 = vrsqrt.pop %v58
    %v70 = vmul.f32 %v69, %v58
    %v71 = vmul.f32 %v70, %v69
    %v72 = vmul.f32 0.5, %v71
    %v73 = vsub.f32 1.5, %v72
    %v74 = vmul.f32 %v69, %v73
    %vm75 = vweird.f32 %v58
    %vm76 = vweird.f32 %v69
    %vm77 = vmor %vm75, %vm76
    %v78 = vsel %vm77, %v69, %v74
    %v79 = vmul.f32 %v45, %v68
    %v80 = vmul.f32 %v46, %v78
    %v82 = vperm.slane %v27, 0
    %v84 = vmul.f32 %v79, %v82
    %v85 = vmul.f32 %v80, %v82
    %v87 = vperm.slane %v28, 0
    %v89 = vadd.f32 %v84, %v87
    %v90 = vadd.f32 %v85, %v87
    %v91 = vpack.c.bf16 %v89, %v89
    %v92 = vpack.c.bf16 %v90, %v90
    %vm93 = vcmask 257024
    %94 = vst.msk [vmem:[#allocation2] sm:$0xf] %vm93, %v91
    %95 = vst.msk [vmem:[#allocation2 + $0x4] sm:$0xf] %vm93, %v92
  $region25: #{gpt_for_causal_lm.18} parent=0 // pred_fallthru
    _
  %v96 = vld [vmem:[#allocation2] sm:$0xf]
  %v97 = vld [vmem:[#allocation2 + $0x4] sm:$0xf]
  %v98 = vld [vmem:[%s3] sm:$0xff]
  %v99 = vld [vmem:[%s3 + $0x8] sm:$0xff]
  %v100 = vld [vmem:[%s3 + $0x10] sm:$0xff]
  %v101 = vld [vmem:[%s3 + $0x18] sm:$0xff]
  %v102 = vld [vmem:[%s3 + $0x20] sm:$0xff]
  %v103 = vld [vmem:[%s3 + $0x28] sm:$0xff]
  %v104 = vld [vmem:[%s3 + $0x30] sm:$0xff]
  %v105 = vld [vmem:[%s3 + $0x38] sm:$0xff]
  %v106 = vpack.c.bf16 %v99, %v98
  %v107 = vpack.c.bf16 %v101, %v100
  %v108 = vpack.c.bf16 %v103, %v102
  %v109 = vpack.c.bf16 %v105, %v104
  %v110 = vld [vmem:[%s4] sm:$0x1]
  %v112 = vperm.slane %v110, 0
  %v116 = vunpack.c.l.b16 %v96
  %v117 = vunpack.c.l.b16 %v97
  %v118 = vpack.c.b16 %v117, %v116
  %vm119 = vcmask 261120
  %v121 = vsel %vm119, %v118, 0
  %v124 = vsel %vm119, %v106, 0
  %v127 = vsel %vm119, %v107, 0
  %v130 = vsel %vm119, %v108, 0
  %v133 = vsel %vm119, %v109, 0
  %135 = vmatpush.bf16.xpose.msra.mxu0 0
  %136 = vmatpush.bf16.xpose.msra.mxu0 0
  %137 = vmatpush.bf16.xpose.msra.mxu0 0
  %138 = vmatpush.bf16.xpose.msra.mxu0 0
  %139 = vmatpush.bf16.xpose.msra.mxu0 %v133
  %140 = vmatpush.bf16.xpose.msra.mxu0 %v130
  %141 = vmatpush.bf16.xpose.msra.mxu0 %v127
  %142 = vmatpush.bf16.xpose.msra.mxu0 %v124
  %143 = vmatmul.bf16.gmra.mxu0 %v121
  %v144 = vpop.f32.mrf.mxu0
  %v145 = vadd.f32 %v112, %v144
  %v146 = vpop.f32.mrf.mxu0
  %v147 = vadd.f32 %v112, %v146
  %148 = vdwg.mxu0
  %vm149 = vcmask 523264
  %150 = vst.msk [vmem:[%s5] sm:$0xff] %vm149, %v145
  %151 = vst.msk [vmem:[%s5 + $0x8] sm:$0xff] %vm149, %v147
  // Predicated region
  $region26: #{gpt_for_causal_lm.18} parent=0 // pred_check
    _
  $region27: #{gpt_for_causal_lm.18} parent=0 // pred_check_branch
    %153 = sbr.rel (0) target = $region29
  $region28: #{gpt_for_causal_lm.18} parent=0 // pred_region
    _
  $region29: #{gpt_for_causal_lm.18} parent=0 // pred_fallthru
    _
  // Predicated region
  $region30: #{gpt_for_causal_lm.18} parent=0 // pred_check
    _
  $region31: #{gpt_for_causal_lm.18} parent=0 // pred_check_branch
    %155 = sbr.rel (0) target = $region33
  $region32: #{gpt_for_causal_lm.18} parent=0 // pred_region
    _
  $region33: #{gpt_for_causal_lm.18} parent=0 // pred_fallthru
    _

// kernel: gpt_for_causal_lm.19
$region0: #{gpt_for_causal_lm.19}
  #allocation0 [shape = 'u32[]', space=smem, size = 0x4, offset = 0x4, fixed_abs, tag = 'smem constant byte address 0x4 - core index']
  #allocation1 [shape = 'u32[72,128]{1,0:T(1,128)}', space=vmem, size = 0x9000, scoped, tag = 'internal scratch']
  #allocation2 [shape = 'f32[1,1]{1,0:T(1,128)}', space=vmem, size = 0x200, scoped, tag = 'scratch operand']
  %s0 = inlined_call_operand.vmem [shape: f32[16,64], index: 0, kind: input, shape index: {}]
  %s1 = inlined_call_operand.vmem [shape: s32[16,1], index: 1, kind: input, shape index: {}]
  %s2 = inlined_call_operand.hbm [shape: f32[1,1], index: 2, kind: output, shape index: {}]
  %s3 = sld [smem:[#allocation0]]
  $region26: #{gpt_for_causal_lm.19} parent=0
    _
  %s5 = ssub.s32 1, %s3
  %s6 = scalar_select 0, %s5, %s3
  $region1: #{gpt_for_causal_lm.19} parent=0
    #allocation3 [shape = 'u8[512]{0}', space=vmem, size = 0x400, scoped, tag = 'output window, operand 0, single buffered']
    #allocation4 [shape = 's32[1]{0}', space=sflag, size = 0x4, scoped, tag = 'scoped memory for gpt_for_causal_lm.19']
    %7 = vsyncpa [#allocation4], 0
    // Predicated region
    $region2: #{gpt_for_causal_lm.19} parent=1 // pred_check
      _
    $region3: #{gpt_for_causal_lm.19} parent=1 // pred_check_branch
      %9 = sbr.rel (0) target = $region5
    $region4: #{gpt_for_causal_lm.19} parent=1 // pred_region
      _
    $region5: #{gpt_for_causal_lm.19} parent=1 // pred_fallthru
      _
    // Predicated region
    $region6: #{gpt_for_causal_lm.19} parent=1 // pred_check
      _
    $region7: #{gpt_for_causal_lm.19} parent=1 // pred_check_branch
      %11 = sbr.rel (0) target = $region9
    $region8: #{gpt_for_causal_lm.19} parent=1 // pred_region
      _
    $region9: #{gpt_for_causal_lm.19} parent=1 // pred_fallthru
      _
    %p12 = scmp.eq.s32.totalorder 0, 0
    // Predicated region
    $region10: #{gpt_for_causal_lm.19} parent=1 // pred_check
      %p13 = pneg %p12
    $region11: #{gpt_for_causal_lm.19} parent=1 // pred_check_branch
      %15 = sbr.rel (%p13) target = $region13
    $region12: #{gpt_for_causal_lm.19} parent=1 // pred_region
      %vm16 = vcmask 0
      %17 = vst.msk [vmem:[#allocation2] sm:$0x1] %vm16, 0.0
    $region13: #{gpt_for_causal_lm.19} parent=1 // pred_fallthru
      _
    %v18 = vld [vmem:[%s0] sm:$0xff]
    %v19 = vld [vmem:[%s0 + $0x8] sm:$0xff]
    %v20 = vld [vmem:[%s1] sm:$0xff]
    %v21 = vld [vmem:[%s1 + $0x8] sm:$0xff]
    %vm22 = vcmask 523264
    %v23 = vsel %vm22, %v18, -inf
    %24 = vmax.xlane.f32.xlu0 %v23
    %v25 = vpop.xlane.xlu0 %24
    %v26 = vsel %vm22, %v19, -inf
    %27 = vmax.xlane.f32.xlu0 %v26
    %v28 = vpop.xlane.xlu0 %27
    %v29 = vsub.f32 %v18, %v25
    %v30 = vsub.f32 %v19, %v28
    %v31 = vmul.f32 %v29, 1.442695
    %v32 = vpow.pop %v31
    %v33 = vmul.f32 %v30, 1.442695
    %v34 = vpow.pop %v33
    %v35 = vsel %vm22, %v32, 0.0
    %36 = vadd.xlane.f32.xlu0 %v35
    %v37 = vpop.xlane.xlu0 %36
    %v38 = vsel %vm22, %v34, 0.0
    %39 = vadd.xlane.f32.xlu0 %v38
    %v40 = vpop.xlane.xlu0 %39
    %v41 = vlog2.pop %v37
    %v42 = vmul.f32 %v41, 0.6931472
    %v43 = vlog2.pop %v40
    %v44 = vmul.f32 %v43, 0.6931472
    %v45 = vadd.f32 %v25, %v42
    %v46 = vadd.f32 %v28, %v44
    %v47 = vlaneseq
    %v48 = vand.u32 %v47, 127
    %49 = vset.pattern.permute.xlu0 0
    %50 = vperm.xlu0 %49, %v20
    %v51 = vpop.permute.xlu0 %50
    %52 = vset.pattern.permute.xlu0 0
    %53 = vperm.xlu0 %52, %v21
    %v54 = vpop.permute.xlu0 %53
    %vm55 = vcmp.eq.s32.totalorder %v48, %v51
    %vm56 = vcmp.eq.s32.totalorder %v48, %v54
    %v57 = vsel %vm55, %v18, 0.0
    %v58 = vsel %vm56, %v19, 0.0
    %v59 = vsel %vm22, %v57, 0.0
    %60 = vadd.xlane.f32.xlu0 %v59
    %v61 = vpop.xlane.xlu0 %60
    %v62 = vsel %vm22, %v58, 0.0
    %63 = vadd.xlane.f32.xlu0 %v62
    %v64 = vpop.xlane.xlu0 %63
    %v65 = vld [vmem:[#allocation2] sm:$0x1]
    %v66 = vsub.f32 %v45, %v61
    %v67 = vsub.f32 %v46, %v64
    %vm68 = vcmask 7168
    %v69 = vsel %vm68, %v66, 0.0
    %v70 = vsel %vm68, %v67, 0.0
    %v71 = vadd.f32 %v69, %v70
    %72 = vadd.xlane.f32.xlu0 %v71
    %v73 = vpop.xlane.xlu0 %72
    %v74 = vrot.slane %v73, 4
    %v75 = vadd.f32 %v73, %v74
    %v76 = vrot.slane %v75, 2
    %v77 = vadd.f32 %v75, %v76
    %v78 = vrot.slane %v77, 1
    %v79 = vadd.f32 %v77, %v78
    %s80 = vtos %v79
    %v81 = vstv %s80
    %v82 = vadd.f32 %v65, %v81
    %vm83 = vcmask 0
    %84 = vst.msk [vmem:[#allocation2] sm:$0x1] %vm83, %v82
    // Predicated region
    $region14: #{gpt_for_causal_lm.19} parent=1 // pred_check
      %p85 = pneg %p12
    $region15: #{gpt_for_causal_lm.19} parent=1 // pred_check_branch
      %87 = sbr.rel (%p85) target = $region17
    $region16: #{gpt_for_causal_lm.19} parent=1 // pred_region
      %v88 = vld [vmem:[#allocation2] sm:$0x1]
      %v89 = vmul.f32 %v88, 0.0625
      %90 = vst.msk [vmem:[#allocation3] sm:$0x1] %vm83, %v89
    $region17: #{gpt_for_causal_lm.19} parent=1 // pred_fallthru
      _
    // Predicated region
    $region18: #{gpt_for_causal_lm.19} parent=1 // pred_check
      _
    $region19: #{gpt_for_causal_lm.19} parent=1 // pred_check_branch
      %92 = sbr.rel (0) target = $region21
    $region20: #{gpt_for_causal_lm.19} parent=1 // pred_region
      %94 = vsyncadd [#allocation4], 0
      %s96 = sshll.u32 [#allocation3], 4
      %s97 = int_to_ptr.vmem [resolvable:$true] %s96
      %s98 = sshll.u32 %s2, 4
      %s99 = int_to_ptr.hbm [resolvable:$true] %s98
      %101 = dma.vmem_to_hbm [thread:$0]  %s97, 16, %s99, [#allocation4]
    $region21: #{gpt_for_causal_lm.19} parent=1 // pred_fallthru
      _
    // Predicated region
    $region22: #{gpt_for_causal_lm.19} parent=1 // pred_check
      _
    $region23: #{gpt_for_causal_lm.19} parent=1 // pred_check_branch
      %103 = sbr.rel (0) target = $region25
    $region24: #{gpt_for_causal_lm.19} parent=1 // pred_region
      %105 = dma.done [#allocation4], 16
    $region25: #{gpt_for_causal_lm.19} parent=1 // pred_fallthru
      _
    %106 = vsyncpa [#allocation4], 1

</llo_original>
